<compile_context>
chip_gen: v7x
topology: tpu7x:2x2x1
jax: 0.10.0
libtpu: 0.0.40
codegen_flags: <defaults>
</compile_context>

<pallas_src>
import functools
import math

import jax
import jax.numpy as jnp
from jax import lax
from jax.experimental import pallas as pl
from jax.experimental.pallas import tpu as pltpu

_NEG = -1e30                 # large-negative stand-in for -inf (keeps |a-b| finite)
_LOG_HALF = math.log(0.5)    # log_g(h_0) with h_0 == 0, exactly as in the reference


# ---------- numerically stable elementwise helpers (VPU / EUP ops) ----------
def _logaddexp(a, b):
    m = jnp.maximum(a, b)
    return m + jnp.log1p(jnp.exp(-jnp.abs(a - b)))


def _log_g(x):
    # torch: where(x >= 0, log(relu(x) + 0.5), -softplus(-x))
    tail = jnp.log1p(jnp.exp(-jnp.abs(x)))
    return jnp.where(x >= 0.0,
                     jnp.log(jnp.maximum(x, 0.0) + 0.5),
                     jnp.minimum(x, 0.0) - tail)


def _minigru_cell(gates, tri_bf, tidx, seq_len, hidden):
    """gates = [k | h_pre] with shape (B_TILE*T, 2H) -> sigmoid(h)[1:] (B_TILE*T, H)."""
    H = hidden
    k = gates[:, :H]
    h_pre = gates[:, H:]

    # Shared-softplus: ONE exp + ONE log1p serve both log_z and log_coeffs
    # (softplus(y) = max(y,0) + log1p(exp(-|y|))).
    sp_tail = jnp.log1p(jnp.exp(-jnp.abs(k)))
    log_z = jnp.minimum(k, 0.0) - sp_tail            # == -softplus(-k)
    log_coeffs = -jnp.maximum(k, 0.0) - sp_tail      # == -softplus(k)
    log_tilde_h = _log_g(h_pre)

    # torch.cumsum(log_coeffs, dim=-1) as ONE MXU matmul against the hoisted
    # upper-triangular 0/1 matrix.  tri is exact in bf16, so splitting log_coeffs into
    # hi + lo bf16 parts recovers ~f32 accuracy from two default-precision passes
    # (this cumsum lives in log space and feeds exp(), so precision matters).
    hi = log_coeffs.astype(jnp.bfloat16)
    lo = (log_coeffs - hi.astype(jnp.float32)).astype(jnp.bfloat16)
    a_star = (jnp.dot(hi, tri_bf, preferred_element_type=jnp.float32)
              + jnp.dot(lo, tri_bf, preferred_element_type=jnp.float32))

    # logcumsumexp over the time dim: Hillis-Steele tree on the flattened slab.
    # tidx (= t within each sequence) masks both the scan head and the boundaries
    # between the B_TILE sequences stacked on the row axis; the rows rotated in at
    # the top never contribute, so no per-step jnp.full(-inf) constant is needed.
    c = log_z + log_tilde_h - a_star
    off = 1
    while off < seq_len:
        shifted = jnp.concatenate([c[-off:, :], c[:-off, :]], axis=0)  # rows moved down by off
        c = _logaddexp(c, jnp.where(tidx >= off, shifted, _NEG))
        off *= 2

    # fold in the t=0 term of the reference scan: log_values[0] - a_star[0] = log_g(0)
    r = _logaddexp(jnp.float32(_LOG_HALF), c)
    return jax.nn.sigmoid(jnp.exp(a_star + r))       # == sigmoid(h)[:, 1:, :]


def _fused_minigru_kernel(x_ref, tidx_ref, tri_ref, *refs,
                          num_layers, b_tile, seq_len, hidden):
    """One batch tile: all GRU layers + output head, fully VMEM/vreg resident."""
    T, H = seq_len, hidden
    flat_buf = refs[-1]                 # VMEM (B_TILE, T*H)  f32 scratch
    act_buf = refs[-2]                  # VMEM (B_TILE*T, H)  f32 scratch
    out_ref = refs[-3]                  # (B_TILE, Dout)
    bo_ref = refs[-4]                   # (1, Dout)     f32
    wo_ref = refs[-5]                   # (T*H, Dout)   bf16

    tri = tri_ref[...]                  # (H, H) bf16 upper-triangular 0/1
    tidx = tidx_ref[...]                # (B_TILE*T, 1) int32: t of each flattened row

    # layer 0: dim_in == 1 (x.unsqueeze(-1)) -> broadcast outer product on the VPU,
    # no degenerate K=1 MXU matmul.
    gates = x_ref[...] * refs[0][...] + refs[1][...]        # (BT,1)*(1,2H)+(1,2H)
    act = _minigru_cell(gates, tri, tidx, T, H)

    # layers 1..L-1: one fused [z|h] bf16 MXU matmul per layer over the whole tile.
    for layer in range(1, num_layers):
        gates = (jnp.dot(act.astype(jnp.bfloat16), refs[2 * layer][...],
                         preferred_element_type=jnp.float32)
                 + refs[2 * layer + 1][...])
        act = _minigru_cell(gates, tri, tidx, T, H)

    # Output head: flatten act[b, t, h] -> flat[b, t*H + h] through a VMEM scratch
    # (T cheap ld/st-slot copies), then ONE (B_TILE, T*H) x (T*H, Dout) MXU matmul
    # instead of T serialized M=1 matmul pushes.
    act_buf[...] = act
    for t in range(T):
        if b_tile == 1:
            blk = act_buf[pl.ds(t, 1), :]
        else:
            blk = act_buf[pl.ds(t, b_tile, stride=T), :]     # rows b*T + t for all b
        flat_buf[:, t * H:(t + 1) * H] = blk
    head = (jnp.dot(flat_buf[...].astype(jnp.bfloat16), wo_ref[...],
                    preferred_element_type=jnp.float32)
            + bo_ref[...])
    out_ref[...] = head                                       # one (B_TILE, Dout) store


# ------------------------------- wrapper -------------------------------
def _pick_b_tile(batch, seq_len):
    """Largest divisor of `batch` that targets ~256 rows per step but keeps grid >= 2."""
    target = max(1, 256 // max(seq_len, 1))      # fill the MXU M dim (128 on v5e, 256 on v6e/v7x)
    if batch > 1:
        target = min(target, batch // 2)         # keep >= 2 grid steps for v7x's 2 TensorCores
    target = max(target, 1)
    best = 1
    for d in range(1, target + 1):
        if batch % d == 0:
            best = d
    return best


def _pick_vmem_limit():
    try:
        kind = jax.devices()[0].device_kind.lower()
    except Exception:  # pragma: no cover - defensive
        kind = ""
    if "v7" in kind or "7x" in kind:
        return 48 * 1024 * 1024       # v7x: 64 MiB physical VMEM shared by 2 TCs
    return 100 * 1024 * 1024          # v5e / v6e: 128 MiB physical, single TC


def multi_layer_gru_parallel(x, params, b_tile=None):
    """Forward pass of MultiLayerGRUParallel; x: (B, T) float32 -> (B, output_size)."""
    B, T = x.shape
    layers = params["layers"]
    L = len(layers)
    H = layers[0]["wzh"].shape[1] // 2
    Dout = params["wo"].shape[1]

    bt = _pick_b_tile(B, T) if b_tile is None else b_tile
    assert B % bt == 0, "b_tile must divide the batch"
    G = B // bt
    BT = bt * T

    # batch-tiled inputs: one (B_TILE*T, 1) slab of scalars per grid step (== x.unsqueeze(-1))
    x_in = x.astype(jnp.float32).reshape(G, BT, 1)
    # per-row "t within sequence" index, hoisted once (masks the time scan in-kernel)
    tidx = jnp.tile(jnp.arange(T, dtype=jnp.int32), bt).reshape(BT, 1)
    # hidden-dim cumsum matrix; 0/1 entries are exact in bf16
    tri = jnp.triu(jnp.ones((H, H), jnp.bfloat16))
    # head weights: 2-D (T*H, Dout) bf16 (no lane-padded 3-D layout), bias f32
    wo = params["wo"].astype(jnp.bfloat16)
    bo = params["bo"].astype(jnp.float32)

    inputs = [x_in, tidx, tri]
    in_specs = [
        pl.BlockSpec((None, BT, 1), lambda g: (g, 0, 0)),    # per-tile x slab
        pl.BlockSpec((BT, 1), lambda g: (0, 0)),             # grid-invariant
        pl.BlockSpec((H, H), lambda g: (0, 0)),              # grid-invariant
    ]
    for i, layer in enumerate(layers):
        # layer 0 stays f32 (pure VPU broadcast); deeper layers feed bf16 MXU operands
        w = layer["wzh"].astype(jnp.float32 if i == 0 else jnp.bfloat16)
        b = layer["bzh"].astype(jnp.float32)
        inputs += [w, b]
        in_specs += [pl.BlockSpec(w.shape, lambda g: (0, 0)),
                     pl.BlockSpec(b.shape, lambda g: (0, 0))]
    inputs += [wo, bo]
    in_specs += [pl.BlockSpec(wo.shape, lambda g: (0, 0)),
                 pl.BlockSpec(bo.shape, lambda g: (0, 0))]
    # NOTE: the invariant weights are only a few KB at these shapes, so default
    # double-buffering is negligible; with larger H they should get pl.Buffered(1).

    kernel = functools.partial(_fused_minigru_kernel,
                               num_layers=L, b_tile=bt, seq_len=T, hidden=H)

    out = pl.pallas_call(
        kernel,
        out_shape=jax.ShapeDtypeStruct((G, bt, Dout), jnp.float32),
        grid=(G,),                                   # one batch tile per grid step
        in_specs=in_specs,
        out_specs=pl.BlockSpec((None, bt, Dout), lambda g: (g, 0, 0)),
        scratch_shapes=[
            pltpu.VMEM((BT, H), jnp.float32),        # final-layer activations
            pltpu.VMEM((bt, T * H), jnp.float32),    # flattened head input
        ],
        compiler_params=pltpu.CompilerParams(
            # batch-tile axis is independent -> v7x shards it over its 2 TensorCores
            dimension_semantics=("parallel",),
            vmem_limit_bytes=_pick_vmem_limit(),
        ),
    )(*inputs)
    return out.reshape(B, Dout)


# ------------------------------- params -------------------------------
def _init_linear(key, din, dout, xavier=False):
    kw, kb = jax.random.split(key)
    lim_w = (6.0 / (din + dout)) ** 0.5 if xavier else 1.0 / (din ** 0.5)
    lim_b = 1.0 / (din ** 0.5)
    w = jax.random.uniform(kw, (din, dout), jnp.float32, -lim_w, lim_w)
    b = jax.random.uniform(kb, (1, dout), jnp.float32, -lim_b, lim_b)
    return w, b


def init_params(key, input_size, hidden_size, output_size, num_layers, seq_len):
    # forward() does x.unsqueeze(-1), so layer 0 always sees dim_in == 1.
    layers = []
    for i in range(num_layers):
        din = input_size if i == 0 else hidden_size
        key, kz, kh = jax.random.split(key, 3)
        wz, bz = _init_linear(kz, din, hidden_size)
        wh, bh = _init_linear(kh, din, hidden_size)
        # NOTE: linear_i / linear_f exist in the PyTorch __init__ but are never used
        # in forward(), so they are not materialized here.
        layers.append(dict(wzh=jnp.concatenate([wz, wh], axis=1),
                           bzh=jnp.concatenate([bz, bh], axis=1)))
    key, ko = jax.random.split(key)
    wo, bo = _init_linear(ko, hidden_size * seq_len, output_size, xavier=True)
    return dict(layers=layers, wo=wo, bo=bo)


# ----------------------- pure-JAX reference (verification) -----------------------
def _reference(x, params):
    B, T = x.shape
    H = params["layers"][0]["wzh"].shape[1] // 2
    cur = x.astype(jnp.float32)[..., None]
    for layer in params["layers"]:
        g = cur @ layer["wzh"] + layer["bzh"]
        k, h_pre = g[..., :H], g[..., H:]
        log_z = -jax.nn.softplus(-k)
        log_coeffs = -jax.nn.softplus(k)
        log_tilde_h = jnp.where(h_pre >= 0,
                                jnp.log(jnp.maximum(h_pre, 0.0) + 0.5),
                                -jax.nn.softplus(-h_pre))
        log_h0 = jnp.full((B, 1, H), math.log(0.5), jnp.float32)
        a_star = jnp.pad(jnp.cumsum(log_coeffs, axis=-1), ((0, 0), (1, 0), (0, 0)))
        log_values = jnp.concatenate([log_h0, log_z + log_tilde_h], axis=1)
        scan = lax.associative_scan(jnp.logaddexp, log_values - a_star, axis=1)
        cur = jax.nn.sigmoid(jnp.exp(a_star + scan))[:, 1:, :]
    return cur.reshape(B, -1) @ params["wo"] + params["bo"]


if __name__ == "__main__":
    B, SEQ, INPUT, HIDDEN, OUTPUT, LAYERS = 2, 8, 1, 32, 4, 2
    key = jax.random.PRNGKey(0)
    kx, kp = jax.random.split(key)
    x = jax.random.normal(kx, (B, SEQ), jnp.float32)   # forward unsqueezes to (B,SEQ,1)
    params = init_params(kp, INPUT, HIDDEN, OUTPUT, LAYERS, SEQ)

    fwd = jax.jit(multi_layer_gru_parallel)
    out = fwd(x, params)
    jax.block_until_ready(out)

    assert out.shape == (B, OUTPUT) and out.dtype == jnp.float32
    assert bool(jnp.all(jnp.isfinite(out)))
    ref = _reference(x, params)
    assert bool(jnp.allclose(out, ref, rtol=1e-2, atol=1e-2)), (out, ref)
    print("KERNEL_OK")
</pallas_src>

<mosaic_0001>
module attributes {stable_mosaic.version = 11 : i64} {
  func.func @_fused_minigru_kernel(%arg0: i32, %arg1: memref<1x8x1xf32, #tpu.memory_space<vmem>>, %arg2: memref<8x1xi32, #tpu.memory_space<vmem>>, %arg3: memref<32x32xbf16, #tpu.memory_space<vmem>>, %arg4: memref<1x64xf32, #tpu.memory_space<vmem>>, %arg5: memref<1x64xf32, #tpu.memory_space<vmem>>, %arg6: memref<32x64xbf16, #tpu.memory_space<vmem>>, %arg7: memref<1x64xf32, #tpu.memory_space<vmem>>, %arg8: memref<256x4xbf16, #tpu.memory_space<vmem>>, %arg9: memref<1x4xf32, #tpu.memory_space<vmem>>, %arg10: memref<1x1x4xf32, #tpu.memory_space<vmem>>, %arg11: memref<8x32xf32, #tpu.memory_space<vmem>>, %arg12: memref<1x256xf32, #tpu.memory_space<vmem>>) attributes {dimension_semantics = [#tpu.dimension_semantics<parallel>], iteration_bounds = array<i64: 2>, scalar_prefetch = 0 : i64, scratch_operands = 2 : i64, tpu.core_type = #tpu.core_type<tc>, window_params = [{transform_indices = @transform_0, window_bounds = array<i64: 1, 8, 1>}, {pipeline_mode = #tpu.pipeline_mode<synchronous>, transform_indices = @transform_1, window_bounds = array<i64: 8, 1>}, {pipeline_mode = #tpu.pipeline_mode<synchronous>, transform_indices = @transform_2, window_bounds = array<i64: 32, 32>}, {pipeline_mode = #tpu.pipeline_mode<synchronous>, transform_indices = @transform_3, window_bounds = array<i64: 1, 64>}, {pipeline_mode = #tpu.pipeline_mode<synchronous>, transform_indices = @transform_4, window_bounds = array<i64: 1, 64>}, {pipeline_mode = #tpu.pipeline_mode<synchronous>, transform_indices = @transform_5, window_bounds = array<i64: 32, 64>}, {pipeline_mode = #tpu.pipeline_mode<synchronous>, transform_indices = @transform_6, window_bounds = array<i64: 1, 64>}, {pipeline_mode = #tpu.pipeline_mode<synchronous>, transform_indices = @transform_7, window_bounds = array<i64: 256, 4>}, {pipeline_mode = #tpu.pipeline_mode<synchronous>, transform_indices = @transform_8, window_bounds = array<i64: 1, 4>}, {transform_indices = @transform_9, window_bounds = array<i64: 1, 1, 4>}]} {
    %c0 = arith.constant 0 : index
    %c0_0 = arith.constant 0 : index
    %0 = vector.load %arg3[%c0, %c0_0] : memref<32x32xbf16, #tpu.memory_space<vmem>>, vector<32x32xbf16>
    %c0_1 = arith.constant 0 : index
    %c0_2 = arith.constant 0 : index
    %1 = vector.load %arg2[%c0_1, %c0_2] : memref<8x1xi32, #tpu.memory_space<vmem>>, vector<8x1xi32>
    %c0_3 = arith.constant 0 : index
    %c0_4 = arith.constant 0 : index
    %c0_5 = arith.constant 0 : index
    %2 = vector.load %arg1[%c0_3, %c0_4, %c0_5] : memref<1x8x1xf32, #tpu.memory_space<vmem>>, vector<1x8x1xf32>
    %3 = vector.shape_cast %2 : vector<1x8x1xf32> to vector<8x1xf32>
    %c0_6 = arith.constant 0 : index
    %c0_7 = arith.constant 0 : index
    %4 = vector.load %arg4[%c0_6, %c0_7] : memref<1x64xf32, #tpu.memory_space<vmem>>, vector<1x64xf32>
    %5 = vector.broadcast %3 : vector<8x1xf32> to vector<8x64xf32>
    %6 = vector.broadcast %4 : vector<1x64xf32> to vector<8x64xf32>
    %7 = arith.mulf %5, %6 : vector<8x64xf32>
    %c0_8 = arith.constant 0 : index
    %c0_9 = arith.constant 0 : index
    %8 = vector.load %arg5[%c0_8, %c0_9] : memref<1x64xf32, #tpu.memory_space<vmem>>, vector<1x64xf32>
    %9 = vector.broadcast %8 : vector<1x64xf32> to vector<8x64xf32>
    %10 = arith.addf %7, %9 : vector<8x64xf32>
    %11 = vector.extract_strided_slice %10 {offsets = [0, 0], sizes = [8, 32], strides = [1, 1]} : vector<8x64xf32> to vector<8x32xf32>
    %12 = vector.extract_strided_slice %10 {offsets = [0, 32], sizes = [8, 32], strides = [1, 1]} : vector<8x64xf32> to vector<8x32xf32>
    %13 = math.absf %11 : vector<8x32xf32>
    %cst = arith.constant 0.000000e+00 : f32
    %14 = vector.broadcast %cst : f32 to vector<8x32xf32>
    %15 = arith.subf %14, %13 : vector<8x32xf32>
    %16 = math.exp %15 : vector<8x32xf32>
    %17 = math.log1p %16 : vector<8x32xf32>
    %cst_10 = arith.constant 0.000000e+00 : f32
    %18 = vector.broadcast %cst_10 : f32 to vector<8x32xf32>
    %19 = arith.minimumf %11, %18 : vector<8x32xf32>
    %20 = arith.subf %19, %17 : vector<8x32xf32>
    %cst_11 = arith.constant 0.000000e+00 : f32
    %21 = vector.broadcast %cst_11 : f32 to vector<8x32xf32>
    %22 = arith.maximumf %11, %21 : vector<8x32xf32>
    %cst_12 = arith.constant 0.000000e+00 : f32
    %23 = vector.broadcast %cst_12 : f32 to vector<8x32xf32>
    %24 = arith.subf %23, %22 : vector<8x32xf32>
    %25 = arith.subf %24, %17 : vector<8x32xf32>
    %26 = math.absf %12 : vector<8x32xf32>
    %cst_13 = arith.constant 0.000000e+00 : f32
    %27 = vector.broadcast %cst_13 : f32 to vector<8x32xf32>
    %28 = arith.subf %27, %26 : vector<8x32xf32>
    %29 = math.exp %28 : vector<8x32xf32>
    %30 = math.log1p %29 : vector<8x32xf32>
    %cst_14 = arith.constant 0.000000e+00 : f32
    %31 = vector.broadcast %cst_14 : f32 to vector<8x32xf32>
    %32 = arith.cmpf oge, %12, %31 : vector<8x32xf32>
    %cst_15 = arith.constant 0.000000e+00 : f32
    %33 = vector.broadcast %cst_15 : f32 to vector<8x32xf32>
    %34 = arith.maximumf %12, %33 : vector<8x32xf32>
    %cst_16 = arith.constant 5.000000e-01 : f32
    %35 = vector.broadcast %cst_16 : f32 to vector<8x32xf32>
    %36 = arith.addf %34, %35 : vector<8x32xf32>
    %37 = math.log %36 : vector<8x32xf32>
    %cst_17 = arith.constant 0.000000e+00 : f32
    %38 = vector.broadcast %cst_17 : f32 to vector<8x32xf32>
    %39 = arith.minimumf %12, %38 : vector<8x32xf32>
    %40 = arith.subf %39, %30 : vector<8x32xf32>
    %41 = arith.select %32, %37, %40 : vector<8x32xi1>, vector<8x32xf32>
    %42 = arith.truncf %25 : vector<8x32xf32> to vector<8x32xbf16>
    %43 = arith.extf %42 : vector<8x32xbf16> to vector<8x32xf32>
    %44 = arith.subf %25, %43 : vector<8x32xf32>
    %45 = arith.truncf %44 : vector<8x32xf32> to vector<8x32xbf16>
    %cst_18 = arith.constant dense<0.000000e+00> : vector<8x32xf32>
    %46 = tpu.matmul %42, %0, %cst_18 {dimension_numbers = #tpu.dot_dimension_numbers<[1], [0], [0], [1], [0, 0, 1, 1], [], []>} : vector<8x32xbf16>, vector<32x32xbf16>, vector<8x32xf32> -> vector<8x32xf32>
    %cst_19 = arith.constant dense<0.000000e+00> : vector<8x32xf32>
    %47 = tpu.matmul %45, %0, %cst_19 {dimension_numbers = #tpu.dot_dimension_numbers<[1], [0], [0], [1], [0, 0, 1, 1], [], []>} : vector<8x32xbf16>, vector<32x32xbf16>, vector<8x32xf32> -> vector<8x32xf32>
    %48 = arith.addf %46, %47 : vector<8x32xf32>
    %49 = arith.addf %20, %41 : vector<8x32xf32>
    %50 = arith.subf %49, %48 : vector<8x32xf32>
    %51 = vector.extract_strided_slice %50 {offsets = [7, 0], sizes = [1, 32], strides = [1, 1]} : vector<8x32xf32> to vector<1x32xf32>
    %52 = vector.extract_strided_slice %50 {offsets = [0, 0], sizes = [7, 32], strides = [1, 1]} : vector<8x32xf32> to vector<7x32xf32>
    %53 = tpu.concatenate %51, %52 in 0 : vector<1x32xf32>, vector<7x32xf32> -> vector<8x32xf32>
    %c1_i32 = arith.constant 1 : i32
    %54 = vector.broadcast %c1_i32 : i32 to vector<8x1xi32>
    %55 = arith.cmpi sge, %1, %54 : vector<8x1xi32>
    %cst_20 = arith.constant -1.000000e+30 : f32
    %56 = vector.shape_cast %55 : vector<8x1xi1> to vector<8x1xi1>
    %57 = vector.broadcast %56 : vector<8x1xi1> to vector<8x32xi1>
    %58 = vector.broadcast %cst_20 : f32 to vector<8x32xf32>
    %59 = arith.select %57, %53, %58 : vector<8x32xi1>, vector<8x32xf32>
    %60 = arith.maximumf %50, %59 : vector<8x32xf32>
    %61 = arith.subf %50, %59 : vector<8x32xf32>
    %62 = math.absf %61 : vector<8x32xf32>
    %cst_21 = arith.constant 0.000000e+00 : f32
    %63 = vector.broadcast %cst_21 : f32 to vector<8x32xf32>
    %64 = arith.subf %63, %62 : vector<8x32xf32>
    %65 = math.exp %64 : vector<8x32xf32>
    %66 = math.log1p %65 : vector<8x32xf32>
    %67 = arith.addf %60, %66 : vector<8x32xf32>
    %68 = vector.extract_strided_slice %67 {offsets = [6, 0], sizes = [2, 32], strides = [1, 1]} : vector<8x32xf32> to vector<2x32xf32>
    %69 = vector.extract_strided_slice %67 {offsets = [0, 0], sizes = [6, 32], strides = [1, 1]} : vector<8x32xf32> to vector<6x32xf32>
    %70 = tpu.concatenate %68, %69 in 0 : vector<2x32xf32>, vector<6x32xf32> -> vector<8x32xf32>
    %c2_i32 = arith.constant 2 : i32
    %71 = vector.broadcast %c2_i32 : i32 to vector<8x1xi32>
    %72 = arith.cmpi sge, %1, %71 : vector<8x1xi32>
    %cst_22 = arith.constant -1.000000e+30 : f32
    %73 = vector.shape_cast %72 : vector<8x1xi1> to vector<8x1xi1>
    %74 = vector.broadcast %73 : vector<8x1xi1> to vector<8x32xi1>
    %75 = vector.broadcast %cst_22 : f32 to vector<8x32xf32>
    %76 = arith.select %74, %70, %75 : vector<8x32xi1>, vector<8x32xf32>
    %77 = arith.maximumf %67, %76 : vector<8x32xf32>
    %78 = arith.subf %67, %76 : vector<8x32xf32>
    %79 = math.absf %78 : vector<8x32xf32>
    %cst_23 = arith.constant 0.000000e+00 : f32
    %80 = vector.broadcast %cst_23 : f32 to vector<8x32xf32>
    %81 = arith.subf %80, %79 : vector<8x32xf32>
    %82 = math.exp %81 : vector<8x32xf32>
    %83 = math.log1p %82 : vector<8x32xf32>
    %84 = arith.addf %77, %83 : vector<8x32xf32>
    %85 = vector.extract_strided_slice %84 {offsets = [4, 0], sizes = [4, 32], strides = [1, 1]} : vector<8x32xf32> to vector<4x32xf32>
    %86 = vector.extract_strided_slice %84 {offsets = [0, 0], sizes = [4, 32], strides = [1, 1]} : vector<8x32xf32> to vector<4x32xf32>
    %87 = tpu.concatenate %85, %86 in 0 : vector<4x32xf32>, vector<4x32xf32> -> vector<8x32xf32>
    %c4_i32 = arith.constant 4 : i32
    %88 = vector.broadcast %c4_i32 : i32 to vector<8x1xi32>
    %89 = arith.cmpi sge, %1, %88 : vector<8x1xi32>
    %cst_24 = arith.constant -1.000000e+30 : f32
    %90 = vector.shape_cast %89 : vector<8x1xi1> to vector<8x1xi1>
    %91 = vector.broadcast %90 : vector<8x1xi1> to vector<8x32xi1>
    %92 = vector.broadcast %cst_24 : f32 to vector<8x32xf32>
    %93 = arith.select %91, %87, %92 : vector<8x32xi1>, vector<8x32xf32>
    %94 = arith.maximumf %84, %93 : vector<8x32xf32>
    %95 = arith.subf %84, %93 : vector<8x32xf32>
    %96 = math.absf %95 : vector<8x32xf32>
    %cst_25 = arith.constant 0.000000e+00 : f32
    %97 = vector.broadcast %cst_25 : f32 to vector<8x32xf32>
    %98 = arith.subf %97, %96 : vector<8x32xf32>
    %99 = math.exp %98 : vector<8x32xf32>
    %100 = math.log1p %99 : vector<8x32xf32>
    %101 = arith.addf %94, %100 : vector<8x32xf32>
    %cst_26 = arith.constant -0.693147182 : f32
    %102 = vector.broadcast %cst_26 : f32 to vector<8x32xf32>
    %103 = arith.maximumf %102, %101 : vector<8x32xf32>
    %cst_27 = arith.constant -0.693147182 : f32
    %104 = vector.broadcast %cst_27 : f32 to vector<8x32xf32>
    %105 = arith.subf %104, %101 : vector<8x32xf32>
    %106 = math.absf %105 : vector<8x32xf32>
    %cst_28 = arith.constant 0.000000e+00 : f32
    %107 = vector.broadcast %cst_28 : f32 to vector<8x32xf32>
    %108 = arith.subf %107, %106 : vector<8x32xf32>
    %109 = math.exp %108 : vector<8x32xf32>
    %110 = math.log1p %109 : vector<8x32xf32>
    %111 = arith.addf %103, %110 : vector<8x32xf32>
    %112 = arith.addf %48, %111 : vector<8x32xf32>
    %113 = math.exp %112 : vector<8x32xf32>
    %114 = arith.negf %113 : vector<8x32xf32>
    %115 = math.exp %114 : vector<8x32xf32>
    %cst_29 = arith.constant 1.000000e+00 : f32
    %116 = vector.broadcast %cst_29 : f32 to vector<8x32xf32>
    %117 = arith.addf %116, %115 : vector<8x32xf32>
    %118 = arith.divf %116, %117 : vector<8x32xf32>
    %119 = arith.truncf %118 : vector<8x32xf32> to vector<8x32xbf16>
    %c0_30 = arith.constant 0 : index
    %c0_31 = arith.constant 0 : index
    %120 = vector.load %arg6[%c0_30, %c0_31] : memref<32x64xbf16, #tpu.memory_space<vmem>>, vector<32x64xbf16>
    %cst_32 = arith.constant dense<0.000000e+00> : vector<8x64xf32>
    %121 = tpu.matmul %119, %120, %cst_32 {dimension_numbers = #tpu.dot_dimension_numbers<[1], [0], [0], [1], [0, 0, 1, 1], [], []>} : vector<8x32xbf16>, vector<32x64xbf16>, vector<8x64xf32> -> vector<8x64xf32>
    %c0_33 = arith.constant 0 : index
    %c0_34 = arith.constant 0 : index
    %122 = vector.load %arg7[%c0_33, %c0_34] : memref<1x64xf32, #tpu.memory_space<vmem>>, vector<1x64xf32>
    %123 = vector.broadcast %122 : vector<1x64xf32> to vector<8x64xf32>
    %124 = arith.addf %121, %123 : vector<8x64xf32>
    %125 = vector.extract_strided_slice %124 {offsets = [0, 0], sizes = [8, 32], strides = [1, 1]} : vector<8x64xf32> to vector<8x32xf32>
    %126 = vector.extract_strided_slice %124 {offsets = [0, 32], sizes = [8, 32], strides = [1, 1]} : vector<8x64xf32> to vector<8x32xf32>
    %127 = math.absf %125 : vector<8x32xf32>
    %cst_35 = arith.constant 0.000000e+00 : f32
    %128 = vector.broadcast %cst_35 : f32 to vector<8x32xf32>
    %129 = arith.subf %128, %127 : vector<8x32xf32>
    %130 = math.exp %129 : vector<8x32xf32>
    %131 = math.log1p %130 : vector<8x32xf32>
    %cst_36 = arith.constant 0.000000e+00 : f32
    %132 = vector.broadcast %cst_36 : f32 to vector<8x32xf32>
    %133 = arith.minimumf %125, %132 : vector<8x32xf32>
    %134 = arith.subf %133, %131 : vector<8x32xf32>
    %cst_37 = arith.constant 0.000000e+00 : f32
    %135 = vector.broadcast %cst_37 : f32 to vector<8x32xf32>
    %136 = arith.maximumf %125, %135 : vector<8x32xf32>
    %cst_38 = arith.constant 0.000000e+00 : f32
    %137 = vector.broadcast %cst_38 : f32 to vector<8x32xf32>
    %138 = arith.subf %137, %136 : vector<8x32xf32>
    %139 = arith.subf %138, %131 : vector<8x32xf32>
    %140 = math.absf %126 : vector<8x32xf32>
    %cst_39 = arith.constant 0.000000e+00 : f32
    %141 = vector.broadcast %cst_39 : f32 to vector<8x32xf32>
    %142 = arith.subf %141, %140 : vector<8x32xf32>
    %143 = math.exp %142 : vector<8x32xf32>
    %144 = math.log1p %143 : vector<8x32xf32>
    %cst_40 = arith.constant 0.000000e+00 : f32
    %145 = vector.broadcast %cst_40 : f32 to vector<8x32xf32>
    %146 = arith.cmpf oge, %126, %145 : vector<8x32xf32>
    %cst_41 = arith.constant 0.000000e+00 : f32
    %147 = vector.broadcast %cst_41 : f32 to vector<8x32xf32>
    %148 = arith.maximumf %126, %147 : vector<8x32xf32>
    %cst_42 = arith.constant 5.000000e-01 : f32
    %149 = vector.broadcast %cst_42 : f32 to vector<8x32xf32>
    %150 = arith.addf %148, %149 : vector<8x32xf32>
    %151 = math.log %150 : vector<8x32xf32>
    %cst_43 = arith.constant 0.000000e+00 : f32
    %152 = vector.broadcast %cst_43 : f32 to vector<8x32xf32>
    %153 = arith.minimumf %126, %152 : vector<8x32xf32>
    %154 = arith.subf %153, %144 : vector<8x32xf32>
    %155 = arith.select %146, %151, %154 : vector<8x32xi1>, vector<8x32xf32>
    %156 = arith.truncf %139 : vector<8x32xf32> to vector<8x32xbf16>
    %157 = arith.extf %156 : vector<8x32xbf16> to vector<8x32xf32>
    %158 = arith.subf %139, %157 : vector<8x32xf32>
    %159 = arith.truncf %158 : vector<8x32xf32> to vector<8x32xbf16>
    %cst_44 = arith.constant dense<0.000000e+00> : vector<8x32xf32>
    %160 = tpu.matmul %156, %0, %cst_44 {dimension_numbers = #tpu.dot_dimension_numbers<[1], [0], [0], [1], [0, 0, 1, 1], [], []>} : vector<8x32xbf16>, vector<32x32xbf16>, vector<8x32xf32> -> vector<8x32xf32>
    %cst_45 = arith.constant dense<0.000000e+00> : vector<8x32xf32>
    %161 = tpu.matmul %159, %0, %cst_45 {dimension_numbers = #tpu.dot_dimension_numbers<[1], [0], [0], [1], [0, 0, 1, 1], [], []>} : vector<8x32xbf16>, vector<32x32xbf16>, vector<8x32xf32> -> vector<8x32xf32>
    %162 = arith.addf %160, %161 : vector<8x32xf32>
    %163 = arith.addf %134, %155 : vector<8x32xf32>
    %164 = arith.subf %163, %162 : vector<8x32xf32>
    %165 = vector.extract_strided_slice %164 {offsets = [7, 0], sizes = [1, 32], strides = [1, 1]} : vector<8x32xf32> to vector<1x32xf32>
    %166 = vector.extract_strided_slice %164 {offsets = [0, 0], sizes = [7, 32], strides = [1, 1]} : vector<8x32xf32> to vector<7x32xf32>
    %167 = tpu.concatenate %165, %166 in 0 : vector<1x32xf32>, vector<7x32xf32> -> vector<8x32xf32>
    %c1_i32_46 = arith.constant 1 : i32
    %168 = vector.broadcast %c1_i32_46 : i32 to vector<8x1xi32>
    %169 = arith.cmpi sge, %1, %168 : vector<8x1xi32>
    %cst_47 = arith.constant -1.000000e+30 : f32
    %170 = vector.shape_cast %169 : vector<8x1xi1> to vector<8x1xi1>
    %171 = vector.broadcast %170 : vector<8x1xi1> to vector<8x32xi1>
    %172 = vector.broadcast %cst_47 : f32 to vector<8x32xf32>
    %173 = arith.select %171, %167, %172 : vector<8x32xi1>, vector<8x32xf32>
    %174 = arith.maximumf %164, %173 : vector<8x32xf32>
    %175 = arith.subf %164, %173 : vector<8x32xf32>
    %176 = math.absf %175 : vector<8x32xf32>
    %cst_48 = arith.constant 0.000000e+00 : f32
    %177 = vector.broadcast %cst_48 : f32 to vector<8x32xf32>
    %178 = arith.subf %177, %176 : vector<8x32xf32>
    %179 = math.exp %178 : vector<8x32xf32>
    %180 = math.log1p %179 : vector<8x32xf32>
    %181 = arith.addf %174, %180 : vector<8x32xf32>
    %182 = vector.extract_strided_slice %181 {offsets = [6, 0], sizes = [2, 32], strides = [1, 1]} : vector<8x32xf32> to vector<2x32xf32>
    %183 = vector.extract_strided_slice %181 {offsets = [0, 0], sizes = [6, 32], strides = [1, 1]} : vector<8x32xf32> to vector<6x32xf32>
    %184 = tpu.concatenate %182, %183 in 0 : vector<2x32xf32>, vector<6x32xf32> -> vector<8x32xf32>
    %c2_i32_49 = arith.constant 2 : i32
    %185 = vector.broadcast %c2_i32_49 : i32 to vector<8x1xi32>
    %186 = arith.cmpi sge, %1, %185 : vector<8x1xi32>
    %cst_50 = arith.constant -1.000000e+30 : f32
    %187 = vector.shape_cast %186 : vector<8x1xi1> to vector<8x1xi1>
    %188 = vector.broadcast %187 : vector<8x1xi1> to vector<8x32xi1>
    %189 = vector.broadcast %cst_50 : f32 to vector<8x32xf32>
    %190 = arith.select %188, %184, %189 : vector<8x32xi1>, vector<8x32xf32>
    %191 = arith.maximumf %181, %190 : vector<8x32xf32>
    %192 = arith.subf %181, %190 : vector<8x32xf32>
    %193 = math.absf %192 : vector<8x32xf32>
    %cst_51 = arith.constant 0.000000e+00 : f32
    %194 = vector.broadcast %cst_51 : f32 to vector<8x32xf32>
    %195 = arith.subf %194, %193 : vector<8x32xf32>
    %196 = math.exp %195 : vector<8x32xf32>
    %197 = math.log1p %196 : vector<8x32xf32>
    %198 = arith.addf %191, %197 : vector<8x32xf32>
    %199 = vector.extract_strided_slice %198 {offsets = [4, 0], sizes = [4, 32], strides = [1, 1]} : vector<8x32xf32> to vector<4x32xf32>
    %200 = vector.extract_strided_slice %198 {offsets = [0, 0], sizes = [4, 32], strides = [1, 1]} : vector<8x32xf32> to vector<4x32xf32>
    %201 = tpu.concatenate %199, %200 in 0 : vector<4x32xf32>, vector<4x32xf32> -> vector<8x32xf32>
    %c4_i32_52 = arith.constant 4 : i32
    %202 = vector.broadcast %c4_i32_52 : i32 to vector<8x1xi32>
    %203 = arith.cmpi sge, %1, %202 : vector<8x1xi32>
    %cst_53 = arith.constant -1.000000e+30 : f32
    %204 = vector.shape_cast %203 : vector<8x1xi1> to vector<8x1xi1>
    %205 = vector.broadcast %204 : vector<8x1xi1> to vector<8x32xi1>
    %206 = vector.broadcast %cst_53 : f32 to vector<8x32xf32>
    %207 = arith.select %205, %201, %206 : vector<8x32xi1>, vector<8x32xf32>
    %208 = arith.maximumf %198, %207 : vector<8x32xf32>
    %209 = arith.subf %198, %207 : vector<8x32xf32>
    %210 = math.absf %209 : vector<8x32xf32>
    %cst_54 = arith.constant 0.000000e+00 : f32
    %211 = vector.broadcast %cst_54 : f32 to vector<8x32xf32>
    %212 = arith.subf %211, %210 : vector<8x32xf32>
    %213 = math.exp %212 : vector<8x32xf32>
    %214 = math.log1p %213 : vector<8x32xf32>
    %215 = arith.addf %208, %214 : vector<8x32xf32>
    %cst_55 = arith.constant -0.693147182 : f32
    %216 = vector.broadcast %cst_55 : f32 to vector<8x32xf32>
    %217 = arith.maximumf %216, %215 : vector<8x32xf32>
    %cst_56 = arith.constant -0.693147182 : f32
    %218 = vector.broadcast %cst_56 : f32 to vector<8x32xf32>
    %219 = arith.subf %218, %215 : vector<8x32xf32>
    %220 = math.absf %219 : vector<8x32xf32>
    %cst_57 = arith.constant 0.000000e+00 : f32
    %221 = vector.broadcast %cst_57 : f32 to vector<8x32xf32>
    %222 = arith.subf %221, %220 : vector<8x32xf32>
    %223 = math.exp %222 : vector<8x32xf32>
    %224 = math.log1p %223 : vector<8x32xf32>
    %225 = arith.addf %217, %224 : vector<8x32xf32>
    %226 = arith.addf %162, %225 : vector<8x32xf32>
    %227 = math.exp %226 : vector<8x32xf32>
    %228 = arith.negf %227 : vector<8x32xf32>
    %229 = math.exp %228 : vector<8x32xf32>
    %cst_58 = arith.constant 1.000000e+00 : f32
    %230 = vector.broadcast %cst_58 : f32 to vector<8x32xf32>
    %231 = arith.addf %230, %229 : vector<8x32xf32>
    %232 = arith.divf %230, %231 : vector<8x32xf32>
    %c0_59 = arith.constant 0 : index
    %c0_60 = arith.constant 0 : index
    %233 = vector.load %arg11[%c0_59, %c0_60] : memref<8x32xf32, #tpu.memory_space<vmem>>, vector<8x32xf32>
    tpu.vector_store %arg11[%c0_59, %c0_60], %232 {strides = array<i32>} : memref<8x32xf32, #tpu.memory_space<vmem>>, vector<8x32xf32>,
    %c0_61 = arith.constant 0 : index
    %c0_62 = arith.constant 0 : index
    %234 = vector.load %arg11[%c0_61, %c0_62] : memref<8x32xf32, #tpu.memory_space<vmem>>, vector<1x32xf32>
    %c0_63 = arith.constant 0 : index
    %c0_64 = arith.constant 0 : index
    %235 = vector.load %arg12[%c0_63, %c0_64] : memref<1x256xf32, #tpu.memory_space<vmem>>, vector<1x32xf32>
    tpu.vector_store %arg12[%c0_63, %c0_64], %234 {strides = array<i32>} : memref<1x256xf32, #tpu.memory_space<vmem>>, vector<1x32xf32>,
    %c1 = arith.constant 1 : index
    %c0_65 = arith.constant 0 : index
    %236 = vector.load %arg11[%c1, %c0_65] : memref<8x32xf32, #tpu.memory_space<vmem>>, vector<1x32xf32>
    %c0_66 = arith.constant 0 : index
    %c32 = arith.constant 32 : index
    %237 = vector.load %arg12[%c0_66, %c32] : memref<1x256xf32, #tpu.memory_space<vmem>>, vector<1x32xf32>
    tpu.vector_store %arg12[%c0_66, %c32], %236 {strides = array<i32>} : memref<1x256xf32, #tpu.memory_space<vmem>>, vector<1x32xf32>,
    %c2 = arith.constant 2 : index
    %c0_67 = arith.constant 0 : index
    %238 = vector.load %arg11[%c2, %c0_67] : memref<8x32xf32, #tpu.memory_space<vmem>>, vector<1x32xf32>
    %c0_68 = arith.constant 0 : index
    %c64 = arith.constant 64 : index
    %239 = vector.load %arg12[%c0_68, %c64] : memref<1x256xf32, #tpu.memory_space<vmem>>, vector<1x32xf32>
    tpu.vector_store %arg12[%c0_68, %c64], %238 {strides = array<i32>} : memref<1x256xf32, #tpu.memory_space<vmem>>, vector<1x32xf32>,
    %c3 = arith.constant 3 : index
    %c0_69 = arith.constant 0 : index
    %240 = vector.load %arg11[%c3, %c0_69] : memref<8x32xf32, #tpu.memory_space<vmem>>, vector<1x32xf32>
    %c0_70 = arith.constant 0 : index
    %c96 = arith.constant 96 : index
    %241 = vector.load %arg12[%c0_70, %c96] : memref<1x256xf32, #tpu.memory_space<vmem>>, vector<1x32xf32>
    tpu.vector_store %arg12[%c0_70, %c96], %240 {strides = array<i32>} : memref<1x256xf32, #tpu.memory_space<vmem>>, vector<1x32xf32>,
    %c4 = arith.constant 4 : index
    %c0_71 = arith.constant 0 : index
    %242 = vector.load %arg11[%c4, %c0_71] : memref<8x32xf32, #tpu.memory_space<vmem>>, vector<1x32xf32>
    %c0_72 = arith.constant 0 : index
    %c128 = arith.constant 128 : index
    %243 = vector.load %arg12[%c0_72, %c128] : memref<1x256xf32, #tpu.memory_space<vmem>>, vector<1x32xf32>
    tpu.vector_store %arg12[%c0_72, %c128], %242 {strides = array<i32>} : memref<1x256xf32, #tpu.memory_space<vmem>>, vector<1x32xf32>,
    %c5 = arith.constant 5 : index
    %c0_73 = arith.constant 0 : index
    %244 = vector.load %arg11[%c5, %c0_73] : memref<8x32xf32, #tpu.memory_space<vmem>>, vector<1x32xf32>
    %c0_74 = arith.constant 0 : index
    %c160 = arith.constant 160 : index
    %245 = vector.load %arg12[%c0_74, %c160] : memref<1x256xf32, #tpu.memory_space<vmem>>, vector<1x32xf32>
    tpu.vector_store %arg12[%c0_74, %c160], %244 {strides = array<i32>} : memref<1x256xf32, #tpu.memory_space<vmem>>, vector<1x32xf32>,
    %c6 = arith.constant 6 : index
    %c0_75 = arith.constant 0 : index
    %246 = vector.load %arg11[%c6, %c0_75] : memref<8x32xf32, #tpu.memory_space<vmem>>, vector<1x32xf32>
    %c0_76 = arith.constant 0 : index
    %c192 = arith.constant 192 : index
    %247 = vector.load %arg12[%c0_76, %c192] : memref<1x256xf32, #tpu.memory_space<vmem>>, vector<1x32xf32>
    tpu.vector_store %arg12[%c0_76, %c192], %246 {strides = array<i32>} : memref<1x256xf32, #tpu.memory_space<vmem>>, vector<1x32xf32>,
    %c7 = arith.constant 7 : index
    %c0_77 = arith.constant 0 : index
    %248 = vector.load %arg11[%c7, %c0_77] : memref<8x32xf32, #tpu.memory_space<vmem>>, vector<1x32xf32>
    %c0_78 = arith.constant 0 : index
    %c224 = arith.constant 224 : index
    %249 = vector.load %arg12[%c0_78, %c224] : memref<1x256xf32, #tpu.memory_space<vmem>>, vector<1x32xf32>
    tpu.vector_store %arg12[%c0_78, %c224], %248 {strides = array<i32>} : memref<1x256xf32, #tpu.memory_space<vmem>>, vector<1x32xf32>,
    %c0_79 = arith.constant 0 : index
    %c0_80 = arith.constant 0 : index
    %250 = vector.load %arg12[%c0_79, %c0_80] : memref<1x256xf32, #tpu.memory_space<vmem>>, vector<1x256xf32>
    %251 = arith.truncf %250 : vector<1x256xf32> to vector<1x256xbf16>
    %c0_81 = arith.constant 0 : index
    %c0_82 = arith.constant 0 : index
    %252 = vector.load %arg8[%c0_81, %c0_82] : memref<256x4xbf16, #tpu.memory_space<vmem>>, vector<256x4xbf16>
    %cst_83 = arith.constant dense<0.000000e+00> : vector<1x4xf32>
    %253 = tpu.matmul %251, %252, %cst_83 {dimension_numbers = #tpu.dot_dimension_numbers<[1], [0], [0], [1], [0, 0, 1, 1], [], []>} : vector<1x256xbf16>, vector<256x4xbf16>, vector<1x4xf32> -> vector<1x4xf32>
    %c0_84 = arith.constant 0 : index
    %c0_85 = arith.constant 0 : index
    %254 = vector.load %arg9[%c0_84, %c0_85] : memref<1x4xf32, #tpu.memory_space<vmem>>, vector<1x4xf32>
    %255 = arith.addf %253, %254 : vector<1x4xf32>
    %c0_86 = arith.constant 0 : index
    %c0_87 = arith.constant 0 : index
    %c0_88 = arith.constant 0 : index
    %256 = vector.load %arg10[%c0_86, %c0_87, %c0_88] : memref<1x1x4xf32, #tpu.memory_space<vmem>>, vector<1x1x4xf32>
    %257 = vector.shape_cast %256 : vector<1x1x4xf32> to vector<1x4xf32>
    %258 = vector.shape_cast %255 : vector<1x4xf32> to vector<1x1x4xf32>
    tpu.vector_store %arg10[%c0_86, %c0_87, %c0_88], %258 {strides = array<i32>} : memref<1x1x4xf32, #tpu.memory_space<vmem>>, vector<1x1x4xf32>,
    return
  }
  func.func @transform_0(%arg0: i32) -> (i32, i32, i32) {
    %c0_i32 = arith.constant 0 : i32
    %c0_i32_0 = arith.constant 0 : i32
    %c0_i32_1 = arith.constant 0 : i32
    return %arg0, %c0_i32, %c0_i32_0 : i32, i32, i32
  }
  func.func @transform_1(%arg0: i32) -> (i32, i32) {
    %c0_i32 = arith.constant 0 : i32
    %c0_i32_0 = arith.constant 0 : i32
    %c0_i32_1 = arith.constant 0 : i32
    return %c0_i32, %c0_i32_0 : i32, i32
  }
  func.func @transform_2(%arg0: i32) -> (i32, i32) {
    %c0_i32 = arith.constant 0 : i32
    %c0_i32_0 = arith.constant 0 : i32
    %c0_i32_1 = arith.constant 0 : i32
    return %c0_i32, %c0_i32_0 : i32, i32
  }
  func.func @transform_3(%arg0: i32) -> (i32, i32) {
    %c0_i32 = arith.constant 0 : i32
    %c0_i32_0 = arith.constant 0 : i32
    %c0_i32_1 = arith.constant 0 : i32
    return %c0_i32, %c0_i32_0 : i32, i32
  }
  func.func @transform_4(%arg0: i32) -> (i32, i32) {
    %c0_i32 = arith.constant 0 : i32
    %c0_i32_0 = arith.constant 0 : i32
    %c0_i32_1 = arith.constant 0 : i32
    return %c0_i32, %c0_i32_0 : i32, i32
  }
  func.func @transform_5(%arg0: i32) -> (i32, i32) {
    %c0_i32 = arith.constant 0 : i32
    %c0_i32_0 = arith.constant 0 : i32
    %c0_i32_1 = arith.constant 0 : i32
    return %c0_i32, %c0_i32_0 : i32, i32
  }
  func.func @transform_6(%arg0: i32) -> (i32, i32) {
    %c0_i32 = arith.constant 0 : i32
    %c0_i32_0 = arith.constant 0 : i32
    %c0_i32_1 = arith.constant 0 : i32
    return %c0_i32, %c0_i32_0 : i32, i32
  }
  func.func @transform_7(%arg0: i32) -> (i32, i32) {
    %c0_i32 = arith.constant 0 : i32
    %c0_i32_0 = arith.constant 0 : i32
    %c0_i32_1 = arith.constant 0 : i32
    return %c0_i32, %c0_i32_0 : i32, i32
  }
  func.func @transform_8(%arg0: i32) -> (i32, i32) {
    %c0_i32 = arith.constant 0 : i32
    %c0_i32_0 = arith.constant 0 : i32
    %c0_i32_1 = arith.constant 0 : i32
    return %c0_i32, %c0_i32_0 : i32, i32
  }
  func.func @transform_9(%arg0: i32) -> (i32, i32, i32) {
    %c0_i32 = arith.constant 0 : i32
    %c0_i32_0 = arith.constant 0 : i32
    %c0_i32_1 = arith.constant 0 : i32
    return %arg0, %c0_i32, %c0_i32_0 : i32, i32, i32
  }
}

</mosaic_0001>

<llo_original>
// kernel: multi_layer_gru_parallel.1
$region0: #{multi_layer_gru_parallel.1}
  #allocation0 [shape = 'u32[]', space=smem, size = 0x4, offset = 0x4, fixed_abs, tag = 'smem constant byte address 0x4 - core index']
  #allocation1 [shape = 'u32[144,128]{1,0:T(1,128)}', space=vmem, size = 0x12000, scoped, tag = 'internal scratch']
  #allocation2 [shape = 'f32[8,32]{1,0:T(8,128)}', space=vmem, size = 0x1000, scoped, tag = 'scratch operand']
  #allocation3 [shape = 'f32[1,256]{1,0:T(1,128)}', space=vmem, size = 0x400, scoped, tag = 'scratch operand']
  %s0 = inlined_call_operand.hbm [shape: f32[2,8,1], index: 0, kind: input, shape index: {}]
  %s1 = inlined_call_operand.hbm [shape: s32[8,1], index: 1, kind: input, shape index: {}]
  %s2 = inlined_call_operand.hbm [shape: bf16[32,32], index: 2, kind: input, shape index: {}]
  %s3 = inlined_call_operand.hbm [shape: f32[1,64], index: 3, kind: input, shape index: {}]
  %s4 = inlined_call_operand.hbm [shape: f32[1,64], index: 4, kind: input, shape index: {}]
  %s5 = inlined_call_operand.hbm [shape: bf16[32,64], index: 5, kind: input, shape index: {}]
  %s6 = inlined_call_operand.hbm [shape: f32[1,64], index: 6, kind: input, shape index: {}]
  %s7 = inlined_call_operand.hbm [shape: bf16[256,4], index: 7, kind: input, shape index: {}]
  %s8 = inlined_call_operand.hbm [shape: f32[1,4], index: 8, kind: input, shape index: {}]
  %s9 = inlined_call_operand.hbm [shape: f32[2,1,4], index: 9, kind: output, shape index: {}]
  %s10 = sld [smem:[#allocation0]]
  $region105: #{multi_layer_gru_parallel.1} parent=0
    _
  %s12 = ssub.s32 1, %s10
  %s13 = scalar_select 0, %s12, %s10
  $region1: #{multi_layer_gru_parallel.1} parent=0
    #allocation4 [shape = 'u8[8192]{0}', space=vmem, size = 0x2000, scoped, tag = 'input window, operand 0']
    #allocation5 [shape = 's32[2]{0}', space=sflag, size = 0x8, scoped, tag = 'scoped memory for multi_layer_gru_parallel.1']
    #allocation6 [shape = 's32[2]{0}', space=sflag, size = 0x8, scoped, tag = 'scoped memory for multi_layer_gru_parallel.1']
    #allocation7 [shape = 'u8[4096]{0}', space=vmem, size = 0x1000, scoped, tag = 'input window, operand 1, single buffered']
    #allocation8 [shape = 's32[1]{0}', space=sflag, size = 0x4, scoped, tag = 'scoped memory for multi_layer_gru_parallel.1']
    #allocation9 [shape = 'u8[8192]{0}', space=vmem, size = 0x2000, scoped, tag = 'input window, operand 2, single buffered']
    #allocation10 [shape = 'u8[512]{0}', space=vmem, size = 0x400, scoped, tag = 'input window, operand 3, single buffered']
    #allocation11 [shape = 's32[1]{0}', space=sflag, size = 0x4, scoped, tag = 'scoped memory for multi_layer_gru_parallel.1']
    #allocation12 [shape = 'u8[512]{0}', space=vmem, size = 0x400, scoped, tag = 'input window, operand 4, single buffered']
    #allocation13 [shape = 'u8[8192]{0}', space=vmem, size = 0x2000, scoped, tag = 'input window, operand 5, single buffered']
    #allocation14 [shape = 's32[1]{0}', space=sflag, size = 0x4, scoped, tag = 'scoped memory for multi_layer_gru_parallel.1']
    #allocation15 [shape = 'u8[512]{0}', space=vmem, size = 0x400, scoped, tag = 'input window, operand 6, single buffered']
    #allocation16 [shape = 'u8[65536]{0}', space=vmem, size = 0x10000, scoped, tag = 'input window, operand 7, single buffered']
    #allocation17 [shape = 's32[1]{0}', space=sflag, size = 0x4, scoped, tag = 'scoped memory for multi_layer_gru_parallel.1']
    #allocation18 [shape = 'u8[512]{0}', space=vmem, size = 0x400, scoped, tag = 'input window, operand 8, single buffered']
    #allocation19 [shape = 'u8[1024]{0}', space=vmem, size = 0x400, scoped, tag = 'output window, operand 0']
    %14 = vsyncpa [#allocation5], 0
    %s15 = scalar_lea.sflag [#allocation5], 1
    %16 = vsyncpa %s15, 0
    %17 = vsyncpa [#allocation8], 0
    %18 = vsyncpa [#allocation11], 0
    %19 = vsyncpa [#allocation14], 0
    %20 = vsyncpa [#allocation17], 0
    %21 = vsyncpa [#allocation6], 0
    %s22 = scalar_lea.sflag [#allocation6], 1
    %23 = vsyncpa %s22, 0
    loop: start=0, step=1, limit=4
    $region2: #{multi_layer_gru_parallel.1} parent=1 // loop_pre_header
      _
    $region3: #{multi_layer_gru_parallel.1} parent=1 // loop_header
      %s25 = sphi 0, %s29
      %p26 = scmp.ge.s32.totalorder %s25, 4
      %s35 = sphi 0, %s37
      %s38 = sphi 0, %s35
      %s39 = sphi 0, %s38
      %s55 = sphi 0, %s39
      %s59 = sphi 0, %s59
      %s61 = sphi 0, %s59
      %s62 = sphi 0, %s61
      %s76 = sphi 0, %s62
      %s80 = sphi 0, %s80
      %s82 = sphi 0, %s80
      %s83 = sphi 0, %s82
      %s97 = sphi 0, %s83
      %s101 = sphi 0, %s101
      %s103 = sphi 0, %s101
      %s104 = sphi 0, %s103
      %s118 = sphi 0, %s104
      %s122 = sphi 0, %s122
      %s124 = sphi 0, %s122
      %s125 = sphi 0, %s124
      %s139 = sphi 0, %s125
      %s143 = sphi 0, %s143
      %s145 = sphi 0, %s143
      %s146 = sphi 0, %s145
      %s160 = sphi 0, %s146
      %s164 = sphi 0, %s164
      %s166 = sphi 0, %s164
      %s167 = sphi 0, %s166
      %s181 = sphi 0, %s167
      %s185 = sphi 0, %s185
      %s187 = sphi 0, %s185
      %s188 = sphi 0, %s187
      %s202 = sphi 0, %s188
      %s206 = sphi 0, %s206
      %s208 = sphi 0, %s206
      %s209 = sphi 0, %s208
      %s223 = sphi 0, %s209
      %s229 = sphi 0, %s231
      %s232 = sphi 0, %s229
      %s233 = sphi 0, %s232
      %s249 = sphi 0, %s233
    $region4: #{multi_layer_gru_parallel.1} parent=1 // loop_header_branch
      %28 = sbr.rel (%p26) target = $region8
    $region5: #{multi_layer_gru_parallel.1} parent=1 // loop_body
      %s30 = ssub.s32 %s25, 1
      %s31 = ssub.s32 %s25, 2
      %s32 = sadd.s32 %s25, 1
      %s33 = ssub.s32 %s25, %s32
      %p34 = scmp.eq.s32.totalorder %s33, 0
      %s36 = sadd.s32 %s35, 1
      %s37 = scalar_select %p34, %s35, %s36
      %p40 = pneg %p34
      %p41 = scmp.eq.s32.totalorder %s25, 1
      %p42 = por %p40, %p41
      %p43 = scmp.ne.s32.totalorder %s35, %s38
      %p44 = scmp.eq.s32.totalorder %s25, 0
      %p45 = por %p43, %p44
      %p46 = scmp.ne.s32.totalorder %s35, %s38
      %p47 = scmp.eq.s32.totalorder %s30, 1
      %p48 = por %p46, %p47
      %p49 = scmp.ne.s32.totalorder %s38, %s39
      %p50 = scmp.eq.s32.totalorder %s30, 0
      %p51 = por %p49, %p50
      %p52 = scmp.ne.s32.totalorder %s38, %s39
      %p53 = scmp.eq.s32.totalorder %s31, 1
      %p54 = por %p52, %p53
      %p56 = scmp.ne.s32.totalorder %s39, %s55
      %p57 = scmp.eq.s32.totalorder %s31, 0
      %p58 = por %p56, %p57
      %s60 = sadd.s32 %s59, 1
      %p63 = scmp.eq.s32.totalorder %s25, 1
      %p64 = scmp.ne.s32.totalorder %s59, %s61
      %p65 = scmp.eq.s32.totalorder %s25, 0
      %p66 = por %p64, %p65
      %p67 = scmp.ne.s32.totalorder %s59, %s61
      %p68 = scmp.eq.s32.totalorder %s30, 1
      %p69 = por %p67, %p68
      %p70 = scmp.ne.s32.totalorder %s61, %s62
      %p71 = scmp.eq.s32.totalorder %s30, 0
      %p72 = por %p70, %p71
      %p73 = scmp.ne.s32.totalorder %s61, %s62
      %p74 = scmp.eq.s32.totalorder %s31, 1
      %p75 = por %p73, %p74
      %p77 = scmp.ne.s32.totalorder %s62, %s76
      %p78 = scmp.eq.s32.totalorder %s31, 0
      %p79 = por %p77, %p78
      %s81 = sadd.s32 %s80, 1
      %p84 = scmp.eq.s32.totalorder %s25, 1
      %p85 = scmp.ne.s32.totalorder %s80, %s82
      %p86 = scmp.eq.s32.totalorder %s25, 0
      %p87 = por %p85, %p86
      %p88 = scmp.ne.s32.totalorder %s80, %s82
      %p89 = scmp.eq.s32.totalorder %s30, 1
      %p90 = por %p88, %p89
      %p91 = scmp.ne.s32.totalorder %s82, %s83
      %p92 = scmp.eq.s32.totalorder %s30, 0
      %p93 = por %p91, %p92
      %p94 = scmp.ne.s32.totalorder %s82, %s83
      %p95 = scmp.eq.s32.totalorder %s31, 1
      %p96 = por %p94, %p95
      %p98 = scmp.ne.s32.totalorder %s83, %s97
      %p99 = scmp.eq.s32.totalorder %s31, 0
      %p100 = por %p98, %p99
      %s102 = sadd.s32 %s101, 1
      %p105 = scmp.eq.s32.totalorder %s25, 1
      %p106 = scmp.ne.s32.totalorder %s101, %s103
      %p107 = scmp.eq.s32.totalorder %s25, 0
      %p108 = por %p106, %p107
      %p109 = scmp.ne.s32.totalorder %s101, %s103
      %p110 = scmp.eq.s32.totalorder %s30, 1
      %p111 = por %p109, %p110
      %p112 = scmp.ne.s32.totalorder %s103, %s104
      %p113 = scmp.eq.s32.totalorder %s30, 0
      %p114 = por %p112, %p113
      %p115 = scmp.ne.s32.totalorder %s103, %s104
      %p116 = scmp.eq.s32.totalorder %s31, 1
      %p117 = por %p115, %p116
      %p119 = scmp.ne.s32.totalorder %s104, %s118
      %p120 = scmp.eq.s32.totalorder %s31, 0
      %p121 = por %p119, %p120
      %s123 = sadd.s32 %s122, 1
      %p126 = scmp.eq.s32.totalorder %s25, 1
      %p127 = scmp.ne.s32.totalorder %s122, %s124
      %p128 = scmp.eq.s32.totalorder %s25, 0
      %p129 = por %p127, %p128
      %p130 = scmp.ne.s32.totalorder %s122, %s124
      %p131 = scmp.eq.s32.totalorder %s30, 1
      %p132 = por %p130, %p131
      %p133 = scmp.ne.s32.totalorder %s124, %s125
      %p134 = scmp.eq.s32.totalorder %s30, 0
      %p135 = por %p133, %p134
      %p136 = scmp.ne.s32.totalorder %s124, %s125
      %p137 = scmp.eq.s32.totalorder %s31, 1
      %p138 = por %p136, %p137
      %p140 = scmp.ne.s32.totalorder %s125, %s139
      %p141 = scmp.eq.s32.totalorder %s31, 0
      %p142 = por %p140, %p141
      %s144 = sadd.s32 %s143, 1
      %p147 = scmp.eq.s32.totalorder %s25, 1
      %p148 = scmp.ne.s32.totalorder %s143, %s145
      %p149 = scmp.eq.s32.totalorder %s25, 0
      %p150 = por %p148, %p149
      %p151 = scmp.ne.s32.totalorder %s143, %s145
      %p152 = scmp.eq.s32.totalorder %s30, 1
      %p153 = por %p151, %p152
      %p154 = scmp.ne.s32.totalorder %s145, %s146
      %p155 = scmp.eq.s32.totalorder %s30, 0
      %p156 = por %p154, %p155
      %p157 = scmp.ne.s32.totalorder %s145, %s146
      %p158 = scmp.eq.s32.totalorder %s31, 1
      %p159 = por %p157, %p158
      %p161 = scmp.ne.s32.totalorder %s146, %s160
      %p162 = scmp.eq.s32.totalorder %s31, 0
      %p163 = por %p161, %p162
      %s165 = sadd.s32 %s164, 1
      %p168 = scmp.eq.s32.totalorder %s25, 1
      %p169 = scmp.ne.s32.totalorder %s164, %s166
      %p170 = scmp.eq.s32.totalorder %s25, 0
      %p171 = por %p169, %p170
      %p172 = scmp.ne.s32.totalorder %s164, %s166
      %p173 = scmp.eq.s32.totalorder %s30, 1
      %p174 = por %p172, %p173
      %p175 = scmp.ne.s32.totalorder %s166, %s167
      %p176 = scmp.eq.s32.totalorder %s30, 0
      %p177 = por %p175, %p176
      %p178 = scmp.ne.s32.totalorder %s166, %s167
      %p179 = scmp.eq.s32.totalorder %s31, 1
      %p180 = por %p178, %p179
      %p182 = scmp.ne.s32.totalorder %s167, %s181
      %p183 = scmp.eq.s32.totalorder %s31, 0
      %p184 = por %p182, %p183
      %s186 = sadd.s32 %s185, 1
      %p189 = scmp.eq.s32.totalorder %s25, 1
      %p190 = scmp.ne.s32.totalorder %s185, %s187
      %p191 = scmp.eq.s32.totalorder %s25, 0
      %p192 = por %p190, %p191
      %p193 = scmp.ne.s32.totalorder %s185, %s187
      %p194 = scmp.eq.s32.totalorder %s30, 1
      %p195 = por %p193, %p194
      %p196 = scmp.ne.s32.totalorder %s187, %s188
      %p197 = scmp.eq.s32.totalorder %s30, 0
      %p198 = por %p196, %p197
      %p199 = scmp.ne.s32.totalorder %s187, %s188
      %p200 = scmp.eq.s32.totalorder %s31, 1
      %p201 = por %p199, %p200
      %p203 = scmp.ne.s32.totalorder %s188, %s202
      %p204 = scmp.eq.s32.totalorder %s31, 0
      %p205 = por %p203, %p204
      %s207 = sadd.s32 %s206, 1
      %p210 = scmp.eq.s32.totalorder %s25, 1
      %p211 = scmp.ne.s32.totalorder %s206, %s208
      %p212 = scmp.eq.s32.totalorder %s25, 0
      %p213 = por %p211, %p212
      %p214 = scmp.ne.s32.totalorder %s206, %s208
      %p215 = scmp.eq.s32.totalorder %s30, 1
      %p216 = por %p214, %p215
      %p217 = scmp.ne.s32.totalorder %s208, %s209
      %p218 = scmp.eq.s32.totalorder %s30, 0
      %p219 = por %p217, %p218
      %p220 = scmp.ne.s32.totalorder %s208, %s209
      %p221 = scmp.eq.s32.totalorder %s31, 1
      %p222 = por %p220, %p221
      %p224 = scmp.ne.s32.totalorder %s209, %s223
      %p225 = scmp.eq.s32.totalorder %s31, 0
      %p226 = por %p224, %p225
      %s227 = ssub.s32 %s25, %s32
      %p228 = scmp.eq.s32.totalorder %s227, 0
      %s230 = sadd.s32 %s229, 1
      %s231 = scalar_select %p228, %s229, %s230
      %p234 = pneg %p228
      %p235 = scmp.eq.s32.totalorder %s25, 1
      %p236 = por %p234, %p235
      %p237 = scmp.ne.s32.totalorder %s229, %s232
      %p238 = scmp.eq.s32.totalorder %s25, 0
      %p239 = por %p237, %p238
      %p240 = scmp.ne.s32.totalorder %s229, %s232
      %p241 = scmp.eq.s32.totalorder %s30, 1
      %p242 = por %p240, %p241
      %p243 = scmp.ne.s32.totalorder %s232, %s233
      %p244 = scmp.eq.s32.totalorder %s30, 0
      %p245 = por %p243, %p244
      %p246 = scmp.ne.s32.totalorder %s232, %s233
      %p247 = scmp.eq.s32.totalorder %s31, 1
      %p248 = por %p246, %p247
      %p250 = scmp.ne.s32.totalorder %s233, %s249
      %p251 = scmp.eq.s32.totalorder %s31, 0
      %p252 = por %p250, %p251
      %p253 = scmp.le.s32.totalorder 1, %s25
      %p254 = scmp.lt.s32.totalorder %s25, 3
      %p255 = pnand %p253, %p254
      %p256 = pneg %p255
      // Predicated region
      $region9: #{multi_layer_gru_parallel.1} parent=5 // pred_check
        _
      $region10: #{multi_layer_gru_parallel.1} parent=5 // pred_check_branch
        %258 = sbr.rel (%p255) target = $region12
      $region11: #{multi_layer_gru_parallel.1} parent=5 // pred_region
        %s259 = ssub.s32 %s25, 1
        // Predicated region
        $region13: #{multi_layer_gru_parallel.1} parent=11 // pred_check
          %p260 = pneg %p72
        $region14: #{multi_layer_gru_parallel.1} parent=11 // pred_check_branch
          %262 = sbr.rel (%p260) target = $region16
        $region15: #{multi_layer_gru_parallel.1} parent=11 // pred_region
          %s264 = ssub.s32 128, 128
          %265 = vsyncadd [#allocation8], %s264
          %s267 = sshll.u32 [#allocation7], 4
          %s268 = int_to_ptr.vmem [resolvable:$true] %s267
          %270 = dma.hbm_to_vmem [thread:$0]  %s1, 128, %s268, [#allocation8]
        $region16: #{multi_layer_gru_parallel.1} parent=11 // pred_fallthru
          _
        // Predicated region
        $region17: #{multi_layer_gru_parallel.1} parent=11 // pred_check
          %p271 = pneg %p93
        $region18: #{multi_layer_gru_parallel.1} parent=11 // pred_check_branch
          %273 = sbr.rel (%p271) target = $region20
        $region19: #{multi_layer_gru_parallel.1} parent=11 // pred_region
          %s275 = ssub.s32 256, 256
          %276 = vsyncadd [#allocation8], %s275
          %s277 = sshll.u32 [#allocation9], 4
          %s278 = int_to_ptr.vmem [resolvable:$true] %s277
          %283 = dma.hbm_to_vmem [thread:$0]  %s2, 256, %s278, [#allocation8], 64, 64, 4
        $region20: #{multi_layer_gru_parallel.1} parent=11 // pred_fallthru
          _
        // Predicated region
        $region21: #{multi_layer_gru_parallel.1} parent=11 // pred_check
          %p284 = pneg %p114
        $region22: #{multi_layer_gru_parallel.1} parent=11 // pred_check_branch
          %286 = sbr.rel (%p284) target = $region24
        $region23: #{multi_layer_gru_parallel.1} parent=11 // pred_region
          %s288 = ssub.s32 16, 16
          %289 = vsyncadd [#allocation11], %s288
          %s291 = sshll.u32 [#allocation10], 4
          %s292 = int_to_ptr.vmem [resolvable:$true] %s291
          %294 = dma.hbm_to_vmem [thread:$0]  %s3, 16, %s292, [#allocation11]
        $region24: #{multi_layer_gru_parallel.1} parent=11 // pred_fallthru
          _
        // Predicated region
        $region25: #{multi_layer_gru_parallel.1} parent=11 // pred_check
          %p295 = pneg %p135
        $region26: #{multi_layer_gru_parallel.1} parent=11 // pred_check_branch
          %297 = sbr.rel (%p295) target = $region28
        $region27: #{multi_layer_gru_parallel.1} parent=11 // pred_region
          %s299 = ssub.s32 16, 16
          %300 = vsyncadd [#allocation11], %s299
          %s302 = sshll.u32 [#allocation12], 4
          %s303 = int_to_ptr.vmem [resolvable:$true] %s302
          %305 = dma.hbm_to_vmem [thread:$0]  %s4, 16, %s303, [#allocation11]
        $region28: #{multi_layer_gru_parallel.1} parent=11 // pred_fallthru
          _
        // Predicated region
        $region29: #{multi_layer_gru_parallel.1} parent=11 // pred_check
          %p306 = pneg %p156
        $region30: #{multi_layer_gru_parallel.1} parent=11 // pred_check_branch
          %308 = sbr.rel (%p306) target = $region32
        $region31: #{multi_layer_gru_parallel.1} parent=11 // pred_region
          %s310 = ssub.s32 256, 256
          %311 = vsyncadd [#allocation14], %s310
          %s312 = sshll.u32 [#allocation13], 4
          %s313 = int_to_ptr.vmem [resolvable:$true] %s312
          %318 = dma.hbm_to_vmem [thread:$0]  %s5, 256, %s313, [#allocation14], 64, 64, 4
        $region32: #{multi_layer_gru_parallel.1} parent=11 // pred_fallthru
          _
        // Predicated region
        $region33: #{multi_layer_gru_parallel.1} parent=11 // pred_check
          %p319 = pneg %p177
        $region34: #{multi_layer_gru_parallel.1} parent=11 // pred_check_branch
          %321 = sbr.rel (%p319) target = $region36
        $region35: #{multi_layer_gru_parallel.1} parent=11 // pred_region
          %s323 = ssub.s32 16, 16
          %324 = vsyncadd [#allocation14], %s323
          %s326 = sshll.u32 [#allocation15], 4
          %s327 = int_to_ptr.vmem [resolvable:$true] %s326
          %329 = dma.hbm_to_vmem [thread:$0]  %s6, 16, %s327, [#allocation14]
        $region36: #{multi_layer_gru_parallel.1} parent=11 // pred_fallthru
          _
        // Predicated region
        $region37: #{multi_layer_gru_parallel.1} parent=11 // pred_check
          %p330 = pneg %p198
        $region38: #{multi_layer_gru_parallel.1} parent=11 // pred_check_branch
          %332 = sbr.rel (%p330) target = $region40
        $region39: #{multi_layer_gru_parallel.1} parent=11 // pred_region
          %s334 = ssub.s32 2048, 2048
          %335 = vsyncadd [#allocation17], %s334
          %s336 = sshll.u32 [#allocation16], 4
          %s337 = int_to_ptr.vmem [resolvable:$true] %s336
          %342 = dma.hbm_to_vmem [thread:$0]  %s7, 2048, %s337, [#allocation17], 64, 64, 4
        $region40: #{multi_layer_gru_parallel.1} parent=11 // pred_fallthru
          _
        // Predicated region
        $region41: #{multi_layer_gru_parallel.1} parent=11 // pred_check
          %p343 = pneg %p219
        $region42: #{multi_layer_gru_parallel.1} parent=11 // pred_check_branch
          %345 = sbr.rel (%p343) target = $region44
        $region43: #{multi_layer_gru_parallel.1} parent=11 // pred_region
          %s347 = ssub.s32 16, 16
          %348 = vsyncadd [#allocation17], %s347
          %s350 = sshll.u32 [#allocation18], 4
          %s351 = int_to_ptr.vmem [resolvable:$true] %s350
          %353 = dma.hbm_to_vmem [thread:$0]  %s8, 16, %s351, [#allocation17]
        $region44: #{multi_layer_gru_parallel.1} parent=11 // pred_fallthru
          _
      $region12: #{multi_layer_gru_parallel.1} parent=5 // pred_fallthru
        _
      %p354 = scmp.lt.s32.totalorder %s25, 2
      // Predicated region
      $region45: #{multi_layer_gru_parallel.1} parent=5 // pred_check
        %p355 = pneg %p354
      $region46: #{multi_layer_gru_parallel.1} parent=5 // pred_check_branch
        %357 = sbr.rel (%p355) target = $region48
      $region47: #{multi_layer_gru_parallel.1} parent=5 // pred_region
        // Predicated region
        $region49: #{multi_layer_gru_parallel.1} parent=47 // pred_check
          %p358 = pneg %p45
        $region50: #{multi_layer_gru_parallel.1} parent=47 // pred_check_branch
          %360 = sbr.rel (%p358) target = $region52
        $region51: #{multi_layer_gru_parallel.1} parent=47 // pred_region
          %s361 = sand.u32 %s35, 1
          %s362 = scalar_lea.sflag [#allocation5], %s361
          %s363 = sand.u32 %s35, 1
          %s364 = smul.addr %s363, 8
          %s365 = scalar_lea.vmem [#allocation4], %s364
          %s367 = ssub.s32 128, 128
          %368 = vsyncadd %s362, %s367
          %s369 = smul.addr %s25, 128
          %s370 = scalar_lea.hbm %s0, %s369
          %s372 = sshll.u32 %s365, 4
          %s373 = int_to_ptr.vmem [resolvable:$true] %s372
          %375 = dma.hbm_to_vmem [thread:$0]  %s370, 128, %s373, %s362
        $region52: #{multi_layer_gru_parallel.1} parent=47 // pred_fallthru
          _
      $region48: #{multi_layer_gru_parallel.1} parent=5 // pred_fallthru
        _
      %p376 = scmp.le.s32.totalorder 1, %s25
      %p377 = scmp.lt.s32.totalorder %s25, 3
      %p378 = pnand %p376, %p377
      %p379 = pneg %p378
      // Predicated region
      $region53: #{multi_layer_gru_parallel.1} parent=5 // pred_check
        _
      $region54: #{multi_layer_gru_parallel.1} parent=5 // pred_check_branch
        %381 = sbr.rel (%p378) target = $region56
      $region55: #{multi_layer_gru_parallel.1} parent=5 // pred_region
        %s382 = ssub.s32 %s25, 1
        %s383 = sand.u32 %s38, 1
        %s384 = scalar_lea.sflag [#allocation5], %s383
        %s385 = sand.u32 %s38, 1
        %s386 = smul.addr %s385, 8
        %s387 = scalar_lea.vmem [#allocation4], %s386
        // Predicated region
        $region57: #{multi_layer_gru_parallel.1} parent=55 // pred_check
          %p388 = pneg %p51
        $region58: #{multi_layer_gru_parallel.1} parent=55 // pred_check_branch
          %390 = sbr.rel (%p388) target = $region60
        $region59: #{multi_layer_gru_parallel.1} parent=55 // pred_region
          %391 = dma.done %s384, 128
        $region60: #{multi_layer_gru_parallel.1} parent=55 // pred_fallthru
          _
        // Predicated region
        $region61: #{multi_layer_gru_parallel.1} parent=55 // pred_check
          %p392 = pneg %p72
        $region62: #{multi_layer_gru_parallel.1} parent=55 // pred_check_branch
          %394 = sbr.rel (%p392) target = $region64
        $region63: #{multi_layer_gru_parallel.1} parent=55 // pred_region
          %395 = dma.done [#allocation8], 128
        $region64: #{multi_layer_gru_parallel.1} parent=55 // pred_fallthru
          _
        // Predicated region
        $region65: #{multi_layer_gru_parallel.1} parent=55 // pred_check
          %p396 = pneg %p93
        $region66: #{multi_layer_gru_parallel.1} parent=55 // pred_check_branch
          %398 = sbr.rel (%p396) target = $region68
        $region67: #{multi_layer_gru_parallel.1} parent=55 // pred_region
          %399 = dma.done [#allocation8], 256
        $region68: #{multi_layer_gru_parallel.1} parent=55 // pred_fallthru
          _
        // Predicated region
        $region69: #{multi_layer_gru_parallel.1} parent=55 // pred_check
          %p400 = pneg %p114
        $region70: #{multi_layer_gru_parallel.1} parent=55 // pred_check_branch
          %402 = sbr.rel (%p400) target = $region72
        $region71: #{multi_layer_gru_parallel.1} parent=55 // pred_region
          %403 = dma.done [#allocation11], 16
        $region72: #{multi_layer_gru_parallel.1} parent=55 // pred_fallthru
          _
        // Predicated region
        $region73: #{multi_layer_gru_parallel.1} parent=55 // pred_check
          %p404 = pneg %p135
        $region74: #{multi_layer_gru_parallel.1} parent=55 // pred_check_branch
          %406 = sbr.rel (%p404) target = $region76
        $region75: #{multi_layer_gru_parallel.1} parent=55 // pred_region
          %407 = dma.done [#allocation11], 16
        $region76: #{multi_layer_gru_parallel.1} parent=55 // pred_fallthru
          _
        // Predicated region
        $region77: #{multi_layer_gru_parallel.1} parent=55 // pred_check
          %p408 = pneg %p156
        $region78: #{multi_layer_gru_parallel.1} parent=55 // pred_check_branch
          %410 = sbr.rel (%p408) target = $region80
        $region79: #{multi_layer_gru_parallel.1} parent=55 // pred_region
          %411 = dma.done [#allocation14], 256
        $region80: #{multi_layer_gru_parallel.1} parent=55 // pred_fallthru
          _
        // Predicated region
        $region81: #{multi_layer_gru_parallel.1} parent=55 // pred_check
          %p412 = pneg %p177
        $region82: #{multi_layer_gru_parallel.1} parent=55 // pred_check_branch
          %414 = sbr.rel (%p412) target = $region84
        $region83: #{multi_layer_gru_parallel.1} parent=55 // pred_region
          %415 = dma.done [#allocation14], 16
        $region84: #{multi_layer_gru_parallel.1} parent=55 // pred_fallthru
          _
        // Predicated region
        $region85: #{multi_layer_gru_parallel.1} parent=55 // pred_check
          %p416 = pneg %p198
        $region86: #{multi_layer_gru_parallel.1} parent=55 // pred_check_branch
          %418 = sbr.rel (%p416) target = $region88
        $region87: #{multi_layer_gru_parallel.1} parent=55 // pred_region
          %419 = dma.done [#allocation17], 2048
        $region88: #{multi_layer_gru_parallel.1} parent=55 // pred_fallthru
          _
        // Predicated region
        $region89: #{multi_layer_gru_parallel.1} parent=55 // pred_check
          %p420 = pneg %p219
        $region90: #{multi_layer_gru_parallel.1} parent=55 // pred_check_branch
          %422 = sbr.rel (%p420) target = $region92
        $region91: #{multi_layer_gru_parallel.1} parent=55 // pred_region
          %423 = dma.done [#allocation17], 16
        $region92: #{multi_layer_gru_parallel.1} parent=55 // pred_fallthru
          _
        %s424 = sand.u32 %s38, 1
        %s425 = scalar_lea.sflag [#allocation5], %s424
        %s426 = sand.u32 %s38, 1
        %s427 = smul.addr %s426, 8
        %s428 = scalar_lea.vmem [#allocation4], %s427
        %p429 = pneg %p51
        %p430 = pneg %p48
        %p431 = pneg %p72
        %p432 = pneg %p69
        %p433 = pneg %p93
        %p434 = pneg %p90
        %p435 = pneg %p114
        %p436 = pneg %p111
        %p437 = pneg %p135
        %p438 = pneg %p132
        %p439 = pneg %p156
        %p440 = pneg %p153
        %p441 = pneg %p177
        %p442 = pneg %p174
        %p443 = pneg %p198
        %p444 = pneg %p195
        %p445 = pneg %p219
        %p446 = pneg %p216
        %p447 = pneg %p245
        %p448 = pneg %p242
        %s449 = sand.u32 %s232, 1
        %s450 = scalar_lea.sflag [#allocation6], %s449
        %s451 = sand.u32 %s232, 1
        %s452 = scalar_lea.vmem [#allocation19], %s451
        %v454 = vld [vmem:[#allocation9] sm:$0xf]
        %v455 = vld [vmem:[#allocation9 + $0x4] sm:$0xf]
        %v456 = vld [vmem:[#allocation9 + $0x8] sm:$0xf]
        %v457 = vld [vmem:[#allocation9 + $0xc] sm:$0xf]
        %v458 = vld [vmem:[#allocation7] sm:$0xff]
        %v459 = vld [vmem:[%s387] sm:$0xff]
        %v460 = vld [vmem:[#allocation10] sm:$0x1]
        %462 = vset.pattern.permute.xlu0 0
        %463 = vperm.xlu0 %462, %v459
        %v464 = vpop.permute.xlu0 %463
        %v467 = vlaneseq
        %v468 = vshrl.u32 %v467, 7
        %v469 = vsub.s32 0, %v468
        %v470 = vrot.slane %v460, %v469
        %v472 = vmul.f32 %v464, %v470
        %v473 = vld [vmem:[#allocation12] sm:$0x1]
        %v475 = vlaneseq
        %v476 = vshrl.u32 %v475, 7
        %v477 = vsub.s32 0, %v476
        %v478 = vrot.slane %v473, %v477
        %v480 = vadd.f32 %v472, %v478
        %v481 = vand.u32 2147483647, %v480
        %v482 = vsub.f32 0.0, %v481
        %v483 = vmul.f32 %v482, 1.442695
        %v484 = vpow.pop %v483
        %v485 = vadd.f32 %v484, 1.0
        %v486 = vlog2.pop %v485
        %v487 = vmul.f32 %v486, 0.6931472
        %v488 = vmul.f32 -0.5, %v484
        %v489 = vadd.f32 %v488, 1.0
        %v490 = vmul.f32 %v489, %v484
        %v491 = vand.u32 2147483647, %v484
        %vm492 = vcmp.lt.f32.partialorder %v491, 0.0004427343
        %v493 = vsel %vm492, %v490, %v487
        %v494 = vmin.f32 %v480, 0.0
        %v495 = vsub.f32 %v494, %v493
        %v496 = vmax.f32 %v480, 0.0
        %v497 = vsub.f32 0.0, %v496
        %v498 = vsub.f32 %v497, %v493
        %vm499 = vcmp.ge.f32.partialorder %v480, 0.0
        %v500 = vadd.f32 %v496, 0.5
        %v501 = vlog2.pop %v500
        %v502 = vmul.f32 %v501, 0.6931472
        %v503 = vsel %vm499, %v502, %v495
        %v504 = vpack.c.bf16 %v498, %v498
        %v505 = vunpack.c.l.bf16 %v504
        %v506 = vsub.f32 %v498, %v505
        %v507 = vpack.c.bf16 %v506, %v506
        %v512 = vunpack.c.l.b16 %v454
        %v513 = vunpack.c.l.b16 %v455
        %v514 = vunpack.c.l.b16 %v456
        %v515 = vunpack.c.l.b16 %v457
        %v516 = vpack.c.b16 %v513, %v512
        %v517 = vpack.c.b16 %v515, %v514
        %vm520 = vcmask 261120
        %v522 = vsel %vm520, %v507, 0
        %524 = vmatprep.subr.bf16.mxu0 0
        %525 = vmatpush1.bf16.msra.mxu0 %v516
        %526 = vmatprep.subr.bf16.mxu0 0
        %527 = vmatpush1.bf16.msra.mxu0 %v517
        %528 = vmatprep.subr.bf16.mxu0 0
        %529 = vmatpush1.bf16.msra.mxu0 0
        %530 = vmatprep.subr.bf16.mxu0 0
        %531 = vmatpush1.bf16.msra.mxu0 0
        %532 = vmatprep.subr.bf16.mxu0 0
        %533 = vmatpush1.bf16.msra.mxu0 0
        %534 = vmatprep.subr.bf16.mxu0 0
        %535 = vmatpush1.bf16.msra.mxu0 0
        %536 = vmatprep.subr.bf16.mxu0 0
        %537 = vmatpush1.bf16.msra.mxu0 0
        %538 = vmatprep.subr.bf16.mxu0 0
        %539 = vmatpush1.bf16.msra.mxu0 0
        %540 = vmatprep.subr.bf16.mxu0 0
        %541 = vmatpush1.bf16.msra.mxu0 0
        %542 = vmatprep.subr.bf16.mxu0 0
        %543 = vmatpush1.bf16.msra.mxu0 0
        %544 = vmatprep.subr.bf16.mxu0 0
        %545 = vmatpush1.bf16.msra.mxu0 0
        %546 = vmatprep.subr.bf16.mxu0 0
        %547 = vmatpush1.bf16.msra.mxu0 0
        %548 = vmatprep.subr.bf16.mxu0 0
        %549 = vmatpush1.bf16.msra.mxu0 0
        %550 = vmatprep.subr.bf16.mxu0 0
        %551 = vmatpush1.bf16.msra.mxu0 0
        %552 = vmatprep.subr.bf16.mxu0 0
        %553 = vmatpush1.bf16.msra.mxu0 0
        %554 = vmatprep.subr.bf16.mxu0 0
        %555 = vmatpush1.bf16.msra.mxu0 0
        %556 = vmatprep.mubr.bf16.mxu0 0
        %557 = vmatmul.mubr.bf16.gmra.mrb[0].mxu0 %v522
        %v558 = vpop.f32.mrb[0].mxu0
        %v559 = vadd.f32 0.0, %v558
        %v560 = vpop.f32.mrb[0].mxu0
        %v561 = vpop.f32.mrb[0].mxu0
        %v562 = vpop.f32.mrb[0].mxu0
        %563 = vdwg.mxu0
        %v565 = vsel %vm520, %v504, 0
        %567 = vmatprep.subr.bf16.mxu0 0
        %568 = vmatpush1.bf16.msra.mxu0 %v516
        %569 = vmatprep.subr.bf16.mxu0 0
        %570 = vmatpush1.bf16.msra.mxu0 %v517
        %571 = vmatprep.subr.bf16.mxu0 0
        %572 = vmatpush1.bf16.msra.mxu0 0
        %573 = vmatprep.subr.bf16.mxu0 0
        %574 = vmatpush1.bf16.msra.mxu0 0
        %575 = vmatprep.subr.bf16.mxu0 0
        %576 = vmatpush1.bf16.msra.mxu0 0
        %577 = vmatprep.subr.bf16.mxu0 0
        %578 = vmatpush1.bf16.msra.mxu0 0
        %579 = vmatprep.subr.bf16.mxu0 0
        %580 = vmatpush1.bf16.msra.mxu0 0
        %581 = vmatprep.subr.bf16.mxu0 0
        %582 = vmatpush1.bf16.msra.mxu0 0
        %583 = vmatprep.subr.bf16.mxu0 0
        %584 = vmatpush1.bf16.msra.mxu0 0
        %585 = vmatprep.subr.bf16.mxu0 0
        %586 = vmatpush1.bf16.msra.mxu0 0
        %587 = vmatprep.subr.bf16.mxu0 0
        %588 = vmatpush1.bf16.msra.mxu0 0
        %589 = vmatprep.subr.bf16.mxu0 0
        %590 = vmatpush1.bf16.msra.mxu0 0
        %591 = vmatprep.subr.bf16.mxu0 0
        %592 = vmatpush1.bf16.msra.mxu0 0
        %593 = vmatprep.subr.bf16.mxu0 0
        %594 = vmatpush1.bf16.msra.mxu0 0
        %595 = vmatprep.subr.bf16.mxu0 0
        %596 = vmatpush1.bf16.msra.mxu0 0
        %597 = vmatprep.subr.bf16.mxu0 0
        %598 = vmatpush1.bf16.msra.mxu0 0
        %599 = vmatprep.mubr.bf16.mxu0 0
        %600 = vmatmul.mubr.bf16.gmra.mrb[0].mxu0 %v565
        %v601 = vpop.f32.mrb[0].mxu0
        %v602 = vadd.f32 %v559, %v601
        %v603 = vpop.f32.mrb[0].mxu0
        %v604 = vpop.f32.mrb[0].mxu0
        %v605 = vpop.f32.mrb[0].mxu0
        %606 = vdwg.mxu0
        %608 = vrot.lane.b32.xlu0 %v503, 96
        %v609 = vpop.permute.xlu0 %608
        %v611 = vadd.f32 %v495, %v609
        %v612 = vsub.f32 %v611, %v602
        %v614 = vrot.slane %v612, 7
        %vm616 = vcmask 1040384
        %v617 = vsel %vm616, %v614, %v614
        %vm618 = vcmp.ge.s32.totalorder %v458, 1
        %v619 = vsel %vm618, 1, 0
        %620 = vset.pattern.permute.xlu0 0
        %621 = vperm.xlu0 %620, %v619
        %v622 = vpop.permute.xlu0 %621
        %vm623 = vcmp.eq.s32.totalorder %v622, 1
        %v624 = vsel %vm623, %v617, -1e+30
        %v625 = vmax.f32 %v612, %v624
        %v626 = vsub.f32 %v612, %v624
        %v627 = vand.u32 2147483647, %v626
        %v628 = vsub.f32 0.0, %v627
        %v629 = vmul.f32 %v628, 1.442695
        %v630 = vpow.pop %v629
        %v631 = vadd.f32 %v630, 1.0
        %v632 = vlog2.pop %v631
        %v633 = vmul.f32 %v632, 0.6931472
        %v634 = vmul.f32 -0.5, %v630
        %v635 = vadd.f32 %v634, 1.0
        %v636 = vmul.f32 %v635, %v630
        %v637 = vand.u32 2147483647, %v630
        %vm638 = vcmp.lt.f32.partialorder %v637, 0.0004427343
        %v639 = vsel %vm638, %v636, %v633
        %v640 = vadd.f32 %v625, %v639
        %v642 = vrot.slane %v640, 6
        %vm644 = vcmask 1041408
        %v645 = vsel %vm644, %v642, %v642
        %vm646 = vcmp.ge.s32.totalorder %v458, 2
        %v647 = vsel %vm646, 1, 0
        %648 = vset.pattern.permute.xlu0 0
        %649 = vperm.xlu0 %648, %v647
        %v650 = vpop.permute.xlu0 %649
        %vm651 = vcmp.eq.s32.totalorder %v650, 1
        %v652 = vsel %vm651, %v645, -1e+30
        %v653 = vmax.f32 %v640, %v652
        %v654 = vsub.f32 %v640, %v652
        %v655 = vand.u32 2147483647, %v654
        %v656 = vsub.f32 0.0, %v655
        %v657 = vmul.f32 %v656, 1.442695
        %v658 = vpow.pop %v657
        %v659 = vadd.f32 %v658, 1.0
        %v660 = vlog2.pop %v659
        %v661 = vmul.f32 %v660, 0.6931472
        %v662 = vmul.f32 -0.5, %v658
        %v663 = vadd.f32 %v662, 1.0
        %v664 = vmul.f32 %v663, %v658
        %v665 = vand.u32 2147483647, %v658
        %vm666 = vcmp.lt.f32.partialorder %v665, 0.0004427343
        %v667 = vsel %vm666, %v664, %v661
        %v668 = vadd.f32 %v653, %v667
        %v670 = vrot.slane %v668, 4
        %vm672 = vcmask 1043456
        %v673 = vsel %vm672, %v670, %v670
        %vm674 = vcmp.ge.s32.totalorder %v458, 4
        %v675 = vsel %vm674, 1, 0
        %676 = vset.pattern.permute.xlu0 0
        %677 = vperm.xlu0 %676, %v675
        %v678 = vpop.permute.xlu0 %677
        %vm679 = vcmp.eq.s32.totalorder %v678, 1
        %v680 = vsel %vm679, %v673, -1e+30
        %v681 = vmax.f32 %v668, %v680
        %v682 = vsub.f32 %v668, %v680
        %v683 = vand.u32 2147483647, %v682
        %v684 = vsub.f32 0.0, %v683
        %v685 = vmul.f32 %v684, 1.442695
        %v686 = vpow.pop %v685
        %v687 = vadd.f32 %v686, 1.0
        %v688 = vlog2.pop %v687
        %v689 = vmul.f32 %v688, 0.6931472
        %v690 = vmul.f32 -0.5, %v686
        %v691 = vadd.f32 %v690, 1.0
        %v692 = vmul.f32 %v691, %v686
        %v693 = vand.u32 2147483647, %v686
        %vm694 = vcmp.lt.f32.partialorder %v693, 0.0004427343
        %v695 = vsel %vm694, %v692, %v689
        %v696 = vadd.f32 %v681, %v695
        %v697 = vmax.f32 %v696, -0.6931472
        %v698 = vsub.f32 -0.6931472, %v696
        %v699 = vand.u32 2147483647, %v698
        %v700 = vsub.f32 0.0, %v699
        %v701 = vmul.f32 %v700, 1.442695
        %v702 = vpow.pop %v701
        %v703 = vadd.f32 %v702, 1.0
        %v704 = vlog2.pop %v703
        %v705 = vmul.f32 %v704, 0.6931472
        %v706 = vmul.f32 -0.5, %v702
        %v707 = vadd.f32 %v706, 1.0
        %v708 = vmul.f32 %v707, %v702
        %v709 = vand.u32 2147483647, %v702
        %vm710 = vcmp.lt.f32.partialorder %v709, 0.0004427343
        %v711 = vsel %vm710, %v708, %v705
        %v712 = vadd.f32 %v697, %v711
        %v713 = vadd.f32 %v602, %v712
        %v714 = vmul.f32 %v713, 1.442695
        %v715 = vpow.pop %v714
        %v716 = vxor.u32 %v715, 2147483648
        %v717 = vmul.f32 %v716, 1.442695
        %v718 = vpow.pop %v717
        %v719 = vadd.f32 %v718, 1.0
        %v720 = vrcp.pop %v719
        %v721 = vmul.f32 1.0, %v720
        %v722 = vpack.c.bf16 %v721, %v721
        %v723 = vld [vmem:[#allocation13] sm:$0xf]
        %v724 = vld [vmem:[#allocation13 + $0x4] sm:$0xf]
        %v725 = vld [vmem:[#allocation13 + $0x8] sm:$0xf]
        %v726 = vld [vmem:[#allocation13 + $0xc] sm:$0xf]
        %v727 = vld [vmem:[#allocation15] sm:$0x1]
        %v729 = vlaneseq
        %v730 = vshrl.u32 %v729, 7
        %v731 = vsub.s32 0, %v730
        %v732 = vrot.slane %v727, %v731
        %v738 = vunpack.c.l.b16 %v723
        %v739 = vunpack.c.l.b16 %v724
        %v740 = vunpack.c.l.b16 %v725
        %v741 = vunpack.c.l.b16 %v726
        %v742 = vpack.c.b16 %v739, %v738
        %v743 = vpack.c.b16 %v741, %v740
        %v747 = vsel %vm520, %v722, 0
        %749 = vmatprep.subr.bf16.mxu0 0
        %750 = vmatpush1.bf16.msra.mxu0 %v742
        %751 = vmatprep.subr.bf16.mxu0 0
        %752 = vmatpush1.bf16.msra.mxu0 %v743
        %753 = vmatprep.subr.bf16.mxu0 0
        %754 = vmatpush1.bf16.msra.mxu0 0
        %755 = vmatprep.subr.bf16.mxu0 0
        %756 = vmatpush1.bf16.msra.mxu0 0
        %757 = vmatprep.subr.bf16.mxu0 0
        %758 = vmatpush1.bf16.msra.mxu0 0
        %759 = vmatprep.subr.bf16.mxu0 0
        %760 = vmatpush1.bf16.msra.mxu0 0
        %761 = vmatprep.subr.bf16.mxu0 0
        %762 = vmatpush1.bf16.msra.mxu0 0
        %763 = vmatprep.subr.bf16.mxu0 0
        %764 = vmatpush1.bf16.msra.mxu0 0
        %765 = vmatprep.subr.bf16.mxu0 0
        %766 = vmatpush1.bf16.msra.mxu0 0
        %767 = vmatprep.subr.bf16.mxu0 0
        %768 = vmatpush1.bf16.msra.mxu0 0
        %769 = vmatprep.subr.bf16.mxu0 0
        %770 = vmatpush1.bf16.msra.mxu0 0
        %771 = vmatprep.subr.bf16.mxu0 0
        %772 = vmatpush1.bf16.msra.mxu0 0
        %773 = vmatprep.subr.bf16.mxu0 0
        %774 = vmatpush1.bf16.msra.mxu0 0
        %775 = vmatprep.subr.bf16.mxu0 0
        %776 = vmatpush1.bf16.msra.mxu0 0
        %777 = vmatprep.subr.bf16.mxu0 0
        %778 = vmatpush1.bf16.msra.mxu0 0
        %779 = vmatprep.subr.bf16.mxu0 0
        %780 = vmatpush1.bf16.msra.mxu0 0
        %781 = vmatprep.mubr.bf16.mxu0 0
        %782 = vmatmul.mubr.bf16.gmra.mrb[0].mxu0 %v747
        %v783 = vpop.f32.mrb[0].mxu0
        %v784 = vadd.f32 %v732, %v783
        %v785 = vpop.f32.mrb[0].mxu0
        %v786 = vpop.f32.mrb[0].mxu0
        %v787 = vpop.f32.mrb[0].mxu0
        %788 = vdwg.mxu0
        %v789 = vand.u32 2147483647, %v784
        %v790 = vsub.f32 0.0, %v789
        %v791 = vmul.f32 %v790, 1.442695
        %v792 = vpow.pop %v791
        %v793 = vadd.f32 %v792, 1.0
        %v794 = vlog2.pop %v793
        %v795 = vmul.f32 %v794, 0.6931472
        %v796 = vmul.f32 -0.5, %v792
        %v797 = vadd.f32 %v796, 1.0
        %v798 = vmul.f32 %v797, %v792
        %v799 = vand.u32 2147483647, %v792
        %vm800 = vcmp.lt.f32.partialorder %v799, 0.0004427343
        %v801 = vsel %vm800, %v798, %v795
        %v802 = vmin.f32 %v784, 0.0
        %v803 = vsub.f32 %v802, %v801
        %v804 = vmax.f32 %v784, 0.0
        %v805 = vsub.f32 0.0, %v804
        %v806 = vsub.f32 %v805, %v801
        %vm807 = vcmp.ge.f32.partialorder %v784, 0.0
        %v808 = vadd.f32 %v804, 0.5
        %v809 = vlog2.pop %v808
        %v810 = vmul.f32 %v809, 0.6931472
        %v811 = vsel %vm807, %v810, %v803
        %v812 = vpack.c.bf16 %v806, %v806
        %v813 = vunpack.c.l.bf16 %v812
        %v814 = vsub.f32 %v806, %v813
        %v815 = vpack.c.bf16 %v814, %v814
        %v817 = vsel %vm520, %v815, 0
        %819 = vmatprep.subr.bf16.mxu0 0
        %820 = vmatpush1.bf16.msra.mxu0 %v516
        %821 = vmatprep.subr.bf16.mxu0 0
        %822 = vmatpush1.bf16.msra.mxu0 %v517
        %823 = vmatprep.subr.bf16.mxu0 0
        %824 = vmatpush1.bf16.msra.mxu0 0
        %825 = vmatprep.subr.bf16.mxu0 0
        %826 = vmatpush1.bf16.msra.mxu0 0
        %827 = vmatprep.subr.bf16.mxu0 0
        %828 = vmatpush1.bf16.msra.mxu0 0
        %829 = vmatprep.subr.bf16.mxu0 0
        %830 = vmatpush1.bf16.msra.mxu0 0
        %831 = vmatprep.subr.bf16.mxu0 0
        %832 = vmatpush1.bf16.msra.mxu0 0
        %833 = vmatprep.subr.bf16.mxu0 0
        %834 = vmatpush1.bf16.msra.mxu0 0
        %835 = vmatprep.subr.bf16.mxu0 0
        %836 = vmatpush1.bf16.msra.mxu0 0
        %837 = vmatprep.subr.bf16.mxu0 0
        %838 = vmatpush1.bf16.msra.mxu0 0
        %839 = vmatprep.subr.bf16.mxu0 0
        %840 = vmatpush1.bf16.msra.mxu0 0
        %841 = vmatprep.subr.bf16.mxu0 0
        %842 = vmatpush1.bf16.msra.mxu0 0
        %843 = vmatprep.subr.bf16.mxu0 0
        %844 = vmatpush1.bf16.msra.mxu0 0
        %845 = vmatprep.subr.bf16.mxu0 0
        %846 = vmatpush1.bf16.msra.mxu0 0
        %847 = vmatprep.subr.bf16.mxu0 0
        %848 = vmatpush1.bf16.msra.mxu0 0
        %849 = vmatprep.subr.bf16.mxu0 0
        %850 = vmatpush1.bf16.msra.mxu0 0
        %851 = vmatprep.mubr.bf16.mxu0 0
        %852 = vmatmul.mubr.bf16.gmra.mrb[0].mxu0 %v817
        %v853 = vpop.f32.mrb[0].mxu0
        %v854 = vadd.f32 0.0, %v853
        %v855 = vpop.f32.mrb[0].mxu0
        %v856 = vpop.f32.mrb[0].mxu0
        %v857 = vpop.f32.mrb[0].mxu0
        %858 = vdwg.mxu0
        %v860 = vsel %vm520, %v812, 0
        %862 = vmatprep.subr.bf16.mxu0 0
        %863 = vmatpush1.bf16.msra.mxu0 %v516
        %864 = vmatprep.subr.bf16.mxu0 0
        %865 = vmatpush1.bf16.msra.mxu0 %v517
        %866 = vmatprep.subr.bf16.mxu0 0
        %867 = vmatpush1.bf16.msra.mxu0 0
        %868 = vmatprep.subr.bf16.mxu0 0
        %869 = vmatpush1.bf16.msra.mxu0 0
        %870 = vmatprep.subr.bf16.mxu0 0
        %871 = vmatpush1.bf16.msra.mxu0 0
        %872 = vmatprep.subr.bf16.mxu0 0
        %873 = vmatpush1.bf16.msra.mxu0 0
        %874 = vmatprep.subr.bf16.mxu0 0
        %875 = vmatpush1.bf16.msra.mxu0 0
        %876 = vmatprep.subr.bf16.mxu0 0
        %877 = vmatpush1.bf16.msra.mxu0 0
        %878 = vmatprep.subr.bf16.mxu0 0
        %879 = vmatpush1.bf16.msra.mxu0 0
        %880 = vmatprep.subr.bf16.mxu0 0
        %881 = vmatpush1.bf16.msra.mxu0 0
        %882 = vmatprep.subr.bf16.mxu0 0
        %883 = vmatpush1.bf16.msra.mxu0 0
        %884 = vmatprep.subr.bf16.mxu0 0
        %885 = vmatpush1.bf16.msra.mxu0 0
        %886 = vmatprep.subr.bf16.mxu0 0
        %887 = vmatpush1.bf16.msra.mxu0 0
        %888 = vmatprep.subr.bf16.mxu0 0
        %889 = vmatpush1.bf16.msra.mxu0 0
        %890 = vmatprep.subr.bf16.mxu0 0
        %891 = vmatpush1.bf16.msra.mxu0 0
        %892 = vmatprep.subr.bf16.mxu0 0
        %893 = vmatpush1.bf16.msra.mxu0 0
        %894 = vmatprep.mubr.bf16.mxu0 0
        %895 = vmatmul.mubr.bf16.gmra.mrb[0].mxu0 %v860
        %v896 = vpop.f32.mrb[0].mxu0
        %v897 = vadd.f32 %v854, %v896
        %v898 = vpop.f32.mrb[0].mxu0
        %v899 = vpop.f32.mrb[0].mxu0
        %v900 = vpop.f32.mrb[0].mxu0
        %901 = vdwg.mxu0
        %903 = vrot.lane.b32.xlu0 %v811, 96
        %v904 = vpop.permute.xlu0 %903
        %v906 = vadd.f32 %v803, %v904
        %v907 = vsub.f32 %v906, %v897
        %v909 = vrot.slane %v907, 7
        %v911 = vsel %vm616, %v909, %v909
        %v912 = vsel %vm623, %v911, -1e+30
        %v913 = vmax.f32 %v907, %v912
        %v914 = vsub.f32 %v907, %v912
        %v915 = vand.u32 2147483647, %v914
        %v916 = vsub.f32 0.0, %v915
        %v917 = vmul.f32 %v916, 1.442695
        %v918 = vpow.pop %v917
        %v919 = vadd.f32 %v918, 1.0
        %v920 = vlog2.pop %v919
        %v921 = vmul.f32 %v920, 0.6931472
        %v922 = vmul.f32 -0.5, %v918
        %v923 = vadd.f32 %v922, 1.0
        %v924 = vmul.f32 %v923, %v918
        %v925 = vand.u32 2147483647, %v918
        %vm926 = vcmp.lt.f32.partialorder %v925, 0.0004427343
        %v927 = vsel %vm926, %v924, %v921
        %v928 = vadd.f32 %v913, %v927
        %v930 = vrot.slane %v928, 6
        %v932 = vsel %vm644, %v930, %v930
        %v933 = vsel %vm651, %v932, -1e+30
        %v934 = vmax.f32 %v928, %v933
        %v935 = vsub.f32 %v928, %v933
        %v936 = vand.u32 2147483647, %v935
        %v937 = vsub.f32 0.0, %v936
        %v938 = vmul.f32 %v937, 1.442695
        %v939 = vpow.pop %v938
        %v940 = vadd.f32 %v939, 1.0
        %v941 = vlog2.pop %v940
        %v942 = vmul.f32 %v941, 0.6931472
        %v943 = vmul.f32 -0.5, %v939
        %v944 = vadd.f32 %v943, 1.0
        %v945 = vmul.f32 %v944, %v939
        %v946 = vand.u32 2147483647, %v939
        %vm947 = vcmp.lt.f32.partialorder %v946, 0.0004427343
        %v948 = vsel %vm947, %v945, %v942
        %v949 = vadd.f32 %v934, %v948
        %v951 = vrot.slane %v949, 4
        %v953 = vsel %vm672, %v951, %v951
        %v954 = vsel %vm679, %v953, -1e+30
        %v955 = vmax.f32 %v949, %v954
        %v956 = vsub.f32 %v949, %v954
        %v957 = vand.u32 2147483647, %v956
        %v958 = vsub.f32 0.0, %v957
        %v959 = vmul.f32 %v958, 1.442695
        %v960 = vpow.pop %v959
        %v961 = vadd.f32 %v960, 1.0
        %v962 = vlog2.pop %v961
        %v963 = vmul.f32 %v962, 0.6931472
        %v964 = vmul.f32 -0.5, %v960
        %v965 = vadd.f32 %v964, 1.0
        %v966 = vmul.f32 %v965, %v960
        %v967 = vand.u32 2147483647, %v960
        %vm968 = vcmp.lt.f32.partialorder %v967, 0.0004427343
        %v969 = vsel %vm968, %v966, %v963
        %v970 = vadd.f32 %v955, %v969
        %v971 = vmax.f32 %v970, -0.6931472
        %v972 = vsub.f32 -0.6931472, %v970
        %v973 = vand.u32 2147483647, %v972
        %v974 = vsub.f32 0.0, %v973
        %v975 = vmul.f32 %v974, 1.442695
        %v976 = vpow.pop %v975
        %v977 = vadd.f32 %v976, 1.0
        %v978 = vlog2.pop %v977
        %v979 = vmul.f32 %v978, 0.6931472
        %v980 = vmul.f32 -0.5, %v976
        %v981 = vadd.f32 %v980, 1.0
        %v982 = vmul.f32 %v981, %v976
        %v983 = vand.u32 2147483647, %v976
        %vm984 = vcmp.lt.f32.partialorder %v983, 0.0004427343
        %v985 = vsel %vm984, %v982, %v979
        %v986 = vadd.f32 %v971, %v985
        %v987 = vadd.f32 %v897, %v986
        %v988 = vmul.f32 %v987, 1.442695
        %v989 = vpow.pop %v988
        %v990 = vxor.u32 %v989, 2147483648
        %v991 = vmul.f32 %v990, 1.442695
        %v992 = vpow.pop %v991
        %v993 = vadd.f32 %v992, 1.0
        %v994 = vrcp.pop %v993
        %v995 = vmul.f32 1.0, %v994
        %996 = vst.msk [vmem:[#allocation2] sm:$0xff] %vm520, %v995
        %v997 = vld [vmem:[#allocation2] sm:$0x1]
        %v998 = vlaneseq
        %vm999 = vcmp.ge.s32.totalorder %v998, 0
        %vm1000 = vcmp.lt.s32.totalorder %v998, 32
        %vm1001 = vmand %vm999, %vm1000
        %1002 = vst.msk [vmem:[#allocation3] sm:$0x1] %vm1001, %v997
        %v1003 = vld [vmem:[#allocation2 + $0x1] sm:$0x1]
        %v1006 = vunpack.c.l.s4 1966171168
        %v1007 = vunpack.c.0.s8 %v1006
        %v1008 = vlaneseq
        %v1009 = vshrl.u32 %v1008, 7
        %v1010 = vsub.s32 %v1007, %v1009
        %v1011 = vrot.slane %v1003, %v1010
        %v1013 = vunpack.c.l.s4 1966171168
        %v1014 = vunpack.c.0.s8 %v1013
        %v1015 = vlaneseq
        %v1016 = vshrl.u32 %v1015, 7
        %v1017 = vsub.s32 %v1014, %v1016
        %v1018 = vrot.slane %v1011, %v1017
        %1019 = vrot.lane.b32.xlu0 %v1018, 32
        %v1020 = vpop.permute.xlu0 %1019
        %vm1022 = vcmp.ge.s32.totalorder %v998, 32
        %vm1023 = vcmp.lt.s32.totalorder %v998, 64
        %vm1024 = vmand %vm1022, %vm1023
        %1025 = vst.msk [vmem:[#allocation3] sm:$0x1] %vm1024, %v1020
        %v1026 = vld [vmem:[#allocation2 + $0x2] sm:$0x1]
        %v1029 = vunpack.c.l.s4 1966171168
        %v1030 = vunpack.c.0.s8 %v1029
        %v1031 = vlaneseq
        %v1032 = vshrl.u32 %v1031, 7
        %v1033 = vsub.s32 %v1030, %v1032
        %v1034 = vrot.slane %v1026, %v1033
        %v1036 = vunpack.c.l.s4 1966171168
        %v1037 = vunpack.c.0.s8 %v1036
        %v1038 = vlaneseq
        %v1039 = vshrl.u32 %v1038, 7
        %v1040 = vsub.s32 %v1037, %v1039
        %v1041 = vrot.slane %v1034, %v1040
        %1042 = vrot.lane.b32.xlu0 %v1041, 64
        %v1043 = vpop.permute.xlu0 %1042
        %vm1045 = vcmp.ge.s32.totalorder %v998, 64
        %vm1046 = vcmp.lt.s32.totalorder %v998, 96
        %vm1047 = vmand %vm1045, %vm1046
        %1048 = vst.msk [vmem:[#allocation3] sm:$0x1] %vm1047, %v1043
        %v1049 = vld [vmem:[#allocation2 + $0x3] sm:$0x1]
        %v1052 = vunpack.c.l.s4 1966171168
        %v1053 = vunpack.c.0.s8 %v1052
        %v1054 = vlaneseq
        %v1055 = vshrl.u32 %v1054, 7
        %v1056 = vsub.s32 %v1053, %v1055
        %v1057 = vrot.slane %v1049, %v1056
        %v1059 = vunpack.c.l.s4 1966171168
        %v1060 = vunpack.c.0.s8 %v1059
        %v1061 = vlaneseq
        %v1062 = vshrl.u32 %v1061, 7
        %v1063 = vsub.s32 %v1060, %v1062
        %v1064 = vrot.slane %v1057, %v1063
        %1065 = vrot.lane.b32.xlu0 %v1064, 96
        %v1066 = vpop.permute.xlu0 %1065
        %vm1068 = vcmp.ge.s32.totalorder %v998, 96
        %vm1069 = vcmp.lt.s32.totalorder %v998, 128
        %vm1070 = vmand %vm1068, %vm1069
        %1071 = vst.msk [vmem:[#allocation3] sm:$0x1] %vm1070, %v1066
        %v1072 = vld [vmem:[#allocation2 + $0x4] sm:$0x1]
        %1073 = vst.msk [vmem:[#allocation3 + $0x1] sm:$0x1] %vm1001, %v1072
        %v1074 = vld [vmem:[#allocation2 + $0x5] sm:$0x1]
        %v1077 = vunpack.c.l.s4 1966171168
        %v1078 = vunpack.c.0.s8 %v1077
        %v1079 = vlaneseq
        %v1080 = vshrl.u32 %v1079, 7
        %v1081 = vsub.s32 %v1078, %v1080
        %v1082 = vrot.slane %v1074, %v1081
        %v1084 = vunpack.c.l.s4 1966171168
        %v1085 = vunpack.c.0.s8 %v1084
        %v1086 = vlaneseq
        %v1087 = vshrl.u32 %v1086, 7
        %v1088 = vsub.s32 %v1085, %v1087
        %v1089 = vrot.slane %v1082, %v1088
        %1090 = vrot.lane.b32.xlu0 %v1089, 32
        %v1091 = vpop.permute.xlu0 %1090
        %1093 = vst.msk [vmem:[#allocation3 + $0x1] sm:$0x1] %vm1024, %v1091
        %v1094 = vld [vmem:[#allocation2 + $0x6] sm:$0x1]
        %v1097 = vunpack.c.l.s4 1966171168
        %v1098 = vunpack.c.0.s8 %v1097
        %v1099 = vlaneseq
        %v1100 = vshrl.u32 %v1099, 7
        %v1101 = vsub.s32 %v1098, %v1100
        %v1102 = vrot.slane %v1094, %v1101
        %v1104 = vunpack.c.l.s4 1966171168
        %v1105 = vunpack.c.0.s8 %v1104
        %v1106 = vlaneseq
        %v1107 = vshrl.u32 %v1106, 7
        %v1108 = vsub.s32 %v1105, %v1107
        %v1109 = vrot.slane %v1102, %v1108
        %1110 = vrot.lane.b32.xlu0 %v1109, 64
        %v1111 = vpop.permute.xlu0 %1110
        %1113 = vst.msk [vmem:[#allocation3 + $0x1] sm:$0x1] %vm1047, %v1111
        %v1114 = vld [vmem:[#allocation2 + $0x7] sm:$0x1]
        %v1117 = vunpack.c.l.s4 1966171168
        %v1118 = vunpack.c.0.s8 %v1117
        %v1119 = vlaneseq
        %v1120 = vshrl.u32 %v1119, 7
        %v1121 = vsub.s32 %v1118, %v1120
        %v1122 = vrot.slane %v1114, %v1121
        %v1124 = vunpack.c.l.s4 1966171168
        %v1125 = vunpack.c.0.s8 %v1124
        %v1126 = vlaneseq
        %v1127 = vshrl.u32 %v1126, 7
        %v1128 = vsub.s32 %v1125, %v1127
        %v1129 = vrot.slane %v1122, %v1128
        %1130 = vrot.lane.b32.xlu0 %v1129, 96
        %v1131 = vpop.permute.xlu0 %1130
        %1133 = vst.msk [vmem:[#allocation3 + $0x1] sm:$0x1] %vm1070, %v1131
        %v1134 = vld [vmem:[#allocation3] sm:$0x3]
        %v1136 = vlaneseq
        %v1137 = vshrl.u32 %v1136, 7
        %v1138 = vsub.s32 0, %v1137
        %v1139 = vrot.slane %v1134, %v1138
        %v1140 = vlaneseq
        %v1141 = vshrl.u32 %v1140, 7
        %v1142 = vsub.s32 1, %v1141
        %v1143 = vrot.slane %v1134, %v1142
        %v1146 = vpack.c.bf16 %v1139, %v1139
        %v1147 = vpack.c.bf16 %v1143, %v1143
        %v1148 = vld [vmem:[#allocation16] sm:$0xf]
        %v1149 = vld [vmem:[#allocation16 + $0x4] sm:$0xf]
        %v1150 = vld [vmem:[#allocation16 + $0x8] sm:$0xf]
        %v1151 = vld [vmem:[#allocation16 + $0xc] sm:$0xf]
        %v1152 = vld [vmem:[#allocation16 + $0x10] sm:$0xf]
        %v1153 = vld [vmem:[#allocation16 + $0x14] sm:$0xf]
        %v1154 = vld [vmem:[#allocation16 + $0x18] sm:$0xf]
        %v1155 = vld [vmem:[#allocation16 + $0x1c] sm:$0xf]
        %v1156 = vld [vmem:[#allocation16 + $0x20] sm:$0xf]
        %v1157 = vld [vmem:[#allocation16 + $0x24] sm:$0xf]
        %v1158 = vld [vmem:[#allocation16 + $0x28] sm:$0xf]
        %v1159 = vld [vmem:[#allocation16 + $0x2c] sm:$0xf]
        %v1160 = vld [vmem:[#allocation16 + $0x30] sm:$0xf]
        %v1161 = vld [vmem:[#allocation16 + $0x34] sm:$0xf]
        %v1162 = vld [vmem:[#allocation16 + $0x38] sm:$0xf]
        %v1163 = vld [vmem:[#allocation16 + $0x3c] sm:$0xf]
        %v1164 = vld [vmem:[#allocation16 + $0x40] sm:$0xf]
        %v1165 = vld [vmem:[#allocation16 + $0x44] sm:$0xf]
        %v1166 = vld [vmem:[#allocation16 + $0x48] sm:$0xf]
        %v1167 = vld [vmem:[#allocation16 + $0x4c] sm:$0xf]
        %v1168 = vld [vmem:[#allocation16 + $0x50] sm:$0xf]
        %v1169 = vld [vmem:[#allocation16 + $0x54] sm:$0xf]
        %v1170 = vld [vmem:[#allocation16 + $0x58] sm:$0xf]
        %v1171 = vld [vmem:[#allocation16 + $0x5c] sm:$0xf]
        %v1172 = vld [vmem:[#allocation16 + $0x60] sm:$0xf]
        %v1173 = vld [vmem:[#allocation16 + $0x64] sm:$0xf]
        %v1174 = vld [vmem:[#allocation16 + $0x68] sm:$0xf]
        %v1175 = vld [vmem:[#allocation16 + $0x6c] sm:$0xf]
        %v1176 = vld [vmem:[#allocation16 + $0x70] sm:$0xf]
        %v1177 = vld [vmem:[#allocation16 + $0x74] sm:$0xf]
        %v1178 = vld [vmem:[#allocation16 + $0x78] sm:$0xf]
        %v1179 = vld [vmem:[#allocation16 + $0x7c] sm:$0xf]
        %v1180 = vld [vmem:[#allocation18] sm:$0x1]
        %v1213 = vunpack.c.l.b16 %v1148
        %v1214 = vunpack.c.l.b16 %v1149
        %v1215 = vunpack.c.l.b16 %v1150
        %v1216 = vunpack.c.l.b16 %v1151
        %v1217 = vunpack.c.l.b16 %v1152
        %v1218 = vunpack.c.l.b16 %v1153
        %v1219 = vunpack.c.l.b16 %v1154
        %v1220 = vunpack.c.l.b16 %v1155
        %v1221 = vunpack.c.l.b16 %v1156
        %v1222 = vunpack.c.l.b16 %v1157
        %v1223 = vunpack.c.l.b16 %v1158
        %v1224 = vunpack.c.l.b16 %v1159
        %v1225 = vunpack.c.l.b16 %v1160
        %v1226 = vunpack.c.l.b16 %v1161
        %v1227 = vunpack.c.l.b16 %v1162
        %v1228 = vunpack.c.l.b16 %v1163
        %v1229 = vunpack.c.l.b16 %v1164
        %v1230 = vunpack.c.l.b16 %v1165
        %v1231 = vunpack.c.l.b16 %v1166
        %v1232 = vunpack.c.l.b16 %v1167
        %v1233 = vunpack.c.l.b16 %v1168
        %v1234 = vunpack.c.l.b16 %v1169
        %v1235 = vunpack.c.l.b16 %v1170
        %v1236 = vunpack.c.l.b16 %v1171
        %v1237 = vunpack.c.l.b16 %v1172
        %v1238 = vunpack.c.l.b16 %v1173
        %v1239 = vunpack.c.l.b16 %v1174
        %v1240 = vunpack.c.l.b16 %v1175
        %v1241 = vunpack.c.l.b16 %v1176
        %v1242 = vunpack.c.l.b16 %v1177
        %v1243 = vunpack.c.l.b16 %v1178
        %v1244 = vunpack.c.l.b16 %v1179
        %v1245 = vpack.c.b16 %v1214, %v1213
        %v1246 = vpack.c.b16 %v1216, %v1215
        %v1247 = vpack.c.b16 %v1218, %v1217
        %v1248 = vpack.c.b16 %v1220, %v1219
        %v1249 = vpack.c.b16 %v1222, %v1221
        %v1250 = vpack.c.b16 %v1224, %v1223
        %v1251 = vpack.c.b16 %v1226, %v1225
        %v1252 = vpack.c.b16 %v1228, %v1227
        %v1253 = vpack.c.b16 %v1230, %v1229
        %v1254 = vpack.c.b16 %v1232, %v1231
        %v1255 = vpack.c.b16 %v1234, %v1233
        %v1256 = vpack.c.b16 %v1236, %v1235
        %v1257 = vpack.c.b16 %v1238, %v1237
        %v1258 = vpack.c.b16 %v1240, %v1239
        %v1259 = vpack.c.b16 %v1242, %v1241
        %v1260 = vpack.c.b16 %v1244, %v1243
        %1277 = vmatprep.subr.bf16.mxu0 0
        %1278 = vmatpush1.bf16.msra.mxu0 %v1245
        %1279 = vmatprep.subr.bf16.mxu0 0
        %1280 = vmatpush1.bf16.msra.mxu0 %v1246
        %1281 = vmatprep.subr.bf16.mxu0 0
        %1282 = vmatpush1.bf16.msra.mxu0 %v1247
        %1283 = vmatprep.subr.bf16.mxu0 0
        %1284 = vmatpush1.bf16.msra.mxu0 %v1248
        %1285 = vmatprep.subr.bf16.mxu0 0
        %1286 = vmatpush1.bf16.msra.mxu0 %v1249
        %1287 = vmatprep.subr.bf16.mxu0 0
        %1288 = vmatpush1.bf16.msra.mxu0 %v1250
        %1289 = vmatprep.subr.bf16.mxu0 0
        %1290 = vmatpush1.bf16.msra.mxu0 %v1251
        %1291 = vmatprep.subr.bf16.mxu0 0
        %1292 = vmatpush1.bf16.msra.mxu0 %v1252
        %1293 = vmatprep.subr.bf16.mxu0 0
        %1294 = vmatpush1.bf16.msra.mxu0 %v1253
        %1295 = vmatprep.subr.bf16.mxu0 0
        %1296 = vmatpush1.bf16.msra.mxu0 %v1254
        %1297 = vmatprep.subr.bf16.mxu0 0
        %1298 = vmatpush1.bf16.msra.mxu0 %v1255
        %1299 = vmatprep.subr.bf16.mxu0 0
        %1300 = vmatpush1.bf16.msra.mxu0 %v1256
        %1301 = vmatprep.subr.bf16.mxu0 0
        %1302 = vmatpush1.bf16.msra.mxu0 %v1257
        %1303 = vmatprep.subr.bf16.mxu0 0
        %1304 = vmatpush1.bf16.msra.mxu0 %v1258
        %1305 = vmatprep.subr.bf16.mxu0 0
        %1306 = vmatpush1.bf16.msra.mxu0 %v1259
        %1307 = vmatprep.subr.bf16.mxu0 0
        %1308 = vmatpush1.bf16.msra.mxu0 %v1260
        %1309 = vmatprep.mubr.bf16.mxu0 %v1147
        %1310 = vmatmul.mubr.bf16.gmra.mrb[0].mxu0 %v1146
        %v1311 = vpop.f32.mrb[0].mxu0
        %v1312 = vadd.f32 %v1180, %v1311
        %v1313 = vpop.f32.mrb[0].mxu0
        %v1314 = vpop.f32.mrb[0].mxu0
        %v1315 = vpop.f32.mrb[0].mxu0
        %1316 = vdwg.mxu0
        %vm1317 = vcmask 24576
        %1318 = vst.msk [vmem:[%s452] sm:$0x1] %vm1317, %v1312
        %s1319 = sand.u32 %s232, 1
        %s1320 = scalar_lea.sflag [#allocation6], %s1319
        %s1321 = sand.u32 %s232, 1
        %s1322 = scalar_lea.vmem [#allocation19], %s1321
        // Predicated region
        $region93: #{multi_layer_gru_parallel.1} parent=55 // pred_check
          %p1323 = pneg %p242
        $region94: #{multi_layer_gru_parallel.1} parent=55 // pred_check_branch
          %1325 = sbr.rel (%p1323) target = $region96
        $region95: #{multi_layer_gru_parallel.1} parent=55 // pred_region
          %s1327 = ssub.s32 16, 16
          %1328 = vsyncadd %s1320, %s1327
          %s1329 = smul.addr %s30, 16
          %s1330 = scalar_lea.hbm %s9, %s1329
          %s1332 = sshll.u32 %s1322, 4
          %s1333 = int_to_ptr.vmem [resolvable:$true] %s1332
          %1335 = dma.vmem_to_hbm [thread:$0]  %s1333, 16, %s1330, %s1320
        $region96: #{multi_layer_gru_parallel.1} parent=55 // pred_fallthru
          _
      $region56: #{multi_layer_gru_parallel.1} parent=5 // pred_fallthru
        _
      %p1336 = scmp.le.s32.totalorder 2, %s25
      // Predicated region
      $region97: #{multi_layer_gru_parallel.1} parent=5 // pred_check
        %p1337 = pneg %p1336
      $region98: #{multi_layer_gru_parallel.1} parent=5 // pred_check_branch
        %1339 = sbr.rel (%p1337) target = $region100
      $region99: #{multi_layer_gru_parallel.1} parent=5 // pred_region
        %s1340 = ssub.s32 %s25, 2
        // Predicated region
        $region101: #{multi_layer_gru_parallel.1} parent=99 // pred_check
          %p1341 = pneg %p248
        $region102: #{multi_layer_gru_parallel.1} parent=99 // pred_check_branch
          %1343 = sbr.rel (%p1341) target = $region104
        $region103: #{multi_layer_gru_parallel.1} parent=99 // pred_region
          %s1344 = sand.u32 %s233, 1
          %s1345 = scalar_lea.sflag [#allocation6], %s1344
          %s1346 = sand.u32 %s233, 1
          %s1347 = scalar_lea.vmem [#allocation19], %s1346
          %1348 = dma.done %s1345, 16
        $region104: #{multi_layer_gru_parallel.1} parent=99 // pred_fallthru
          _
      $region100: #{multi_layer_gru_parallel.1} parent=5 // pred_fallthru
        _
    $region6: #{multi_layer_gru_parallel.1} parent=1 // loop_footer
      %s29 = sadd.s32 1, %s25
    $region7: #{multi_layer_gru_parallel.1} parent=1 // loop_footer_branch
      %24 = sbr.rel target = $region3
    $region8: #{multi_layer_gru_parallel.1} parent=1 // loop_exit
      _
    %1349 = vsyncpa [#allocation5], 1
    %s1350 = scalar_lea.sflag [#allocation5], 1
    %1351 = vsyncpa %s1350, 1
    %1352 = vsyncpa [#allocation8], 1
    %1353 = vsyncpa [#allocation11], 1
    %1354 = vsyncpa [#allocation14], 1
    %1355 = vsyncpa [#allocation17], 1
    %1356 = vsyncpa [#allocation6], 1
    %s1357 = scalar_lea.sflag [#allocation6], 1
    %1358 = vsyncpa %s1357, 1

</llo_original>
